<compile_context>
chip_gen: v7x
topology: tpu7x:2x2x1
jax: 0.10.0
libtpu: 0.0.40
codegen_flags: <defaults>
</compile_context>

<pallas_src>
import functools

import jax
import jax.numpy as jnp
import numpy as np
from jax.experimental import pallas as pl
from jax.experimental.pallas import tpu as pltpu


def make_rnn_kernel(alpha, T):
    """Fused input-projection + recurrence kernel.

    u_ref:     (B, T, input_size) f32
    noise_ref: (B, T, n)          f32  (pre-scaled by sqrt(2*alpha*sigma_rec^2))
    win_ref:   (input_size, n)    f32  (W_in.T, right-multiplication layout)
    wrec_ref:  (n, n)             f32  (W_rec.T)
    out_ref:   (B, T, n)          f32  (states; out_ref[:, 0, :] == 0)
    """

    def rnn_kernel(u_ref, noise_ref, win_ref, wrec_ref, out_ref):
        win = win_ref[...]    # resident for the whole recurrence
        wrec = wrec_ref[...]
        B = out_ref.shape[0]
        n = out_ref.shape[2]

        # states[:, 0, :] == 0 (matches torch.zeros init in Net.forward)
        s = jnp.zeros((B, n), jnp.float32)
        out_ref[:, 0, :] = s

        # Short, fixed trip count -> fully unrolled; every ref access is a
        # static slice.  The input projection for step t is independent of
        # the loop-carried state, so it overlaps the serial recurrent matmul.
        for t in range(T - 1):
            drive = (
                jnp.dot(u_ref[:, t, :], win, preferred_element_type=jnp.float32)
                + noise_ref[:, t, :]
            )
            pre = jnp.dot(s, wrec, preferred_element_type=jnp.float32) + drive
            s = (1.0 - alpha) * s + alpha * jnp.maximum(pre, 0.0)  # ReLU
            out_ref[:, t + 1, :] = s

    return rnn_kernel


@functools.partial(jax.jit, static_argnames=("alpha",))
def rnn_forward(u, w_rec, w_in, noise, *, alpha):
    """u: (B, T, input_size); w_rec: (n, n) torch layout (out, in);
    w_in: (n, input_size) torch layout; noise: (B, T, n) pre-scaled.
    Returns states: (B, T, n) with states[:, 0, :] == 0."""
    B, T, input_size = u.shape
    n = w_rec.shape[0]

    if T == 1:  # degenerate case: the recurrence loop never runs
        return jnp.zeros((B, 1, n), jnp.float32)

    # Only wrapper work: cast + transpose the tiny weight matrices once so
    # everything right-multiplies (x @ W.T).  A few KiB, fused under jit.
    wrec_t = w_rec.T.astype(jnp.float32)  # (n, n)
    win_t = w_in.T.astype(jnp.float32)    # (input_size, n)
    u_f = u.astype(jnp.float32)
    noise_f = noise.astype(jnp.float32)

    kernel = make_rnn_kernel(float(alpha), T)

    states = pl.pallas_call(
        kernel,
        out_shape=jax.ShapeDtypeStruct((B, T, n), jnp.float32),
        grid_spec=pltpu.PrefetchScalarGridSpec(
            num_scalar_prefetch=0,
            grid=(1,),  # single invocation; whole problem lives in VMEM
            in_specs=[
                pl.BlockSpec((B, T, input_size), lambda i: (0, 0, 0)),
                pl.BlockSpec((B, T, n), lambda i: (0, 0, 0)),
                pl.BlockSpec((input_size, n), lambda i: (0, 0)),
                pl.BlockSpec((n, n), lambda i: (0, 0)),
            ],
            out_specs=pl.BlockSpec((B, T, n), lambda i: (0, 0, 0)),
        ),
        compiler_params=pltpu.CompilerParams(
            dimension_semantics=("arbitrary",),  # sequential recurrence
        ),
    )(u_f, noise_f, win_t, wrec_t)

    return states  # already (B, T, n): no post-kernel transpose / slice


def reference_forward(u, w_rec, w_in, noise, alpha):
    B, T, _ = u.shape
    n = w_rec.shape[0]
    states = [jnp.zeros((B, n), jnp.float32)]
    for i in range(T - 1):
        s = states[i]
        pre = s @ w_rec.T + u[:, i, :] @ w_in.T + noise[:, i, :]
        states.append((1.0 - alpha) * s + alpha * jnp.maximum(pre, 0.0))
    return jnp.stack(states, axis=1)


if __name__ == "__main__":
    # small shapes implied by the module
    B, T, n, input_size = 2, 8, 32, 6
    alpha, sigma_rec = 0.2, 0.15

    key = jax.random.PRNGKey(0)
    k_u, k_rec, k_in, k_noise = jax.random.split(key, 4)

    # deterministic parameter init matching the module's __init__ semantics
    bound = 1.0 / np.sqrt(n)
    w_rec = jax.random.uniform(
        k_rec, (n, n), jnp.float32, minval=-bound, maxval=bound
    )
    w_in = 0.1 + 0.01 * jax.random.normal(k_in, (n, input_size), jnp.float32)
    w_in = jnp.maximum(w_in, 0.0)  # connectivity_constraints: relu on input weights
    # output_layer weights are not used in forward()

    u = jax.random.normal(k_u, (B, T, input_size), jnp.float32)
    # noise is generated inside forward() in PyTorch; here it is passed in,
    # pre-scaled by sqrt(2 * alpha * sigma_rec^2), for determinism.
    noise_scale = np.sqrt(2.0 * alpha * sigma_rec**2)
    noise = noise_scale * jax.random.normal(k_noise, (B, T, n), jnp.float32)

    states = rnn_forward(u, w_rec, w_in, noise, alpha=alpha)
    states = jax.block_until_ready(states)

    ref = reference_forward(u, w_rec, w_in, noise, alpha)
    np.testing.assert_allclose(
        np.asarray(states), np.asarray(ref), atol=1e-5, rtol=1e-5
    )

    print("KERNEL_OK")
</pallas_src>

<mosaic_0001>
module attributes {stable_mosaic.version = 11 : i64} {
  func.func @rnn_kernel(%arg0: i32, %arg1: memref<2x8x6xf32, #tpu.memory_space<vmem>>, %arg2: memref<2x8x32xf32, #tpu.memory_space<vmem>>, %arg3: memref<6x32xf32, #tpu.memory_space<vmem>>, %arg4: memref<32x32xf32, #tpu.memory_space<vmem>>, %arg5: memref<2x8x32xf32, #tpu.memory_space<vmem>>) attributes {dimension_semantics = [#tpu.dimension_semantics<arbitrary>], iteration_bounds = array<i64: 1>, scalar_prefetch = 0 : i64, scratch_operands = 0 : i64, tpu.core_type = #tpu.core_type<tc>, window_params = [{pipeline_mode = #tpu.pipeline_mode<synchronous>, transform_indices = @transform_0, window_bounds = array<i64: 2, 8, 6>}, {pipeline_mode = #tpu.pipeline_mode<synchronous>, transform_indices = @transform_1, window_bounds = array<i64: 2, 8, 32>}, {pipeline_mode = #tpu.pipeline_mode<synchronous>, transform_indices = @transform_2, window_bounds = array<i64: 6, 32>}, {pipeline_mode = #tpu.pipeline_mode<synchronous>, transform_indices = @transform_3, window_bounds = array<i64: 32, 32>}, {pipeline_mode = #tpu.pipeline_mode<synchronous>, transform_indices = @transform_4, window_bounds = array<i64: 2, 8, 32>}]} {
    %c0 = arith.constant 0 : index
    %c0_0 = arith.constant 0 : index
    %0 = vector.load %arg3[%c0, %c0_0] : memref<6x32xf32, #tpu.memory_space<vmem>>, vector<6x32xf32>
    %c0_1 = arith.constant 0 : index
    %c0_2 = arith.constant 0 : index
    %1 = vector.load %arg4[%c0_1, %c0_2] : memref<32x32xf32, #tpu.memory_space<vmem>>, vector<32x32xf32>
    %cst = arith.constant 0.000000e+00 : f32
    %2 = vector.broadcast %cst : f32 to vector<2x32xf32>
    %c0_3 = arith.constant 0 : index
    %c0_4 = arith.constant 0 : index
    %c0_5 = arith.constant 0 : index
    %3 = vector.load %arg5[%c0_3, %c0_4, %c0_5] : memref<2x8x32xf32, #tpu.memory_space<vmem>>, vector<2x1x32xf32>
    %4 = vector.shape_cast %3 : vector<2x1x32xf32> to vector<2x32xf32>
    %5 = vector.shape_cast %2 : vector<2x32xf32> to vector<2x1x32xf32>
    tpu.vector_store %arg5[%c0_3, %c0_4, %c0_5], %5 {strides = array<i32>} : memref<2x8x32xf32, #tpu.memory_space<vmem>>, vector<2x1x32xf32>,
    %c0_6 = arith.constant 0 : index
    %c0_7 = arith.constant 0 : index
    %c0_8 = arith.constant 0 : index
    %6 = vector.load %arg1[%c0_6, %c0_7, %c0_8] : memref<2x8x6xf32, #tpu.memory_space<vmem>>, vector<2x1x6xf32>
    %7 = vector.shape_cast %6 : vector<2x1x6xf32> to vector<2x6xf32>
    %cst_9 = arith.constant dense<0.000000e+00> : vector<2x32xf32>
    %8 = tpu.matmul %7, %0, %cst_9 {dimension_numbers = #tpu.dot_dimension_numbers<[1], [0], [0], [1], [0, 0, 1, 1], [], []>} : vector<2x6xf32>, vector<6x32xf32>, vector<2x32xf32> -> vector<2x32xf32>
    %c0_10 = arith.constant 0 : index
    %c0_11 = arith.constant 0 : index
    %c0_12 = arith.constant 0 : index
    %9 = vector.load %arg2[%c0_10, %c0_11, %c0_12] : memref<2x8x32xf32, #tpu.memory_space<vmem>>, vector<2x1x32xf32>
    %10 = vector.shape_cast %9 : vector<2x1x32xf32> to vector<2x32xf32>
    %11 = arith.addf %8, %10 : vector<2x32xf32>
    %cst_13 = arith.constant dense<0.000000e+00> : vector<2x32xf32>
    %12 = tpu.matmul %2, %1, %cst_13 {dimension_numbers = #tpu.dot_dimension_numbers<[1], [0], [0], [1], [0, 0, 1, 1], [], []>} : vector<2x32xf32>, vector<32x32xf32>, vector<2x32xf32> -> vector<2x32xf32>
    %13 = arith.addf %12, %11 : vector<2x32xf32>
    %cst_14 = arith.constant 8.000000e-01 : f32
    %14 = vector.broadcast %cst_14 : f32 to vector<2x32xf32>
    %15 = arith.mulf %14, %2 : vector<2x32xf32>
    %cst_15 = arith.constant 0.000000e+00 : f32
    %16 = vector.broadcast %cst_15 : f32 to vector<2x32xf32>
    %17 = arith.maximumf %13, %16 : vector<2x32xf32>
    %cst_16 = arith.constant 2.000000e-01 : f32
    %18 = vector.broadcast %cst_16 : f32 to vector<2x32xf32>
    %19 = arith.mulf %18, %17 : vector<2x32xf32>
    %20 = arith.addf %15, %19 : vector<2x32xf32>
    %c0_17 = arith.constant 0 : index
    %c1 = arith.constant 1 : index
    %c0_18 = arith.constant 0 : index
    %21 = vector.load %arg5[%c0_17, %c1, %c0_18] : memref<2x8x32xf32, #tpu.memory_space<vmem>>, vector<2x1x32xf32>
    %22 = vector.shape_cast %21 : vector<2x1x32xf32> to vector<2x32xf32>
    %23 = vector.shape_cast %20 : vector<2x32xf32> to vector<2x1x32xf32>
    tpu.vector_store %arg5[%c0_17, %c1, %c0_18], %23 {strides = array<i32>} : memref<2x8x32xf32, #tpu.memory_space<vmem>>, vector<2x1x32xf32>,
    %c0_19 = arith.constant 0 : index
    %c1_20 = arith.constant 1 : index
    %c0_21 = arith.constant 0 : index
    %24 = vector.load %arg1[%c0_19, %c1_20, %c0_21] : memref<2x8x6xf32, #tpu.memory_space<vmem>>, vector<2x1x6xf32>
    %25 = vector.shape_cast %24 : vector<2x1x6xf32> to vector<2x6xf32>
    %cst_22 = arith.constant dense<0.000000e+00> : vector<2x32xf32>
    %26 = tpu.matmul %25, %0, %cst_22 {dimension_numbers = #tpu.dot_dimension_numbers<[1], [0], [0], [1], [0, 0, 1, 1], [], []>} : vector<2x6xf32>, vector<6x32xf32>, vector<2x32xf32> -> vector<2x32xf32>
    %c0_23 = arith.constant 0 : index
    %c1_24 = arith.constant 1 : index
    %c0_25 = arith.constant 0 : index
    %27 = vector.load %arg2[%c0_23, %c1_24, %c0_25] : memref<2x8x32xf32, #tpu.memory_space<vmem>>, vector<2x1x32xf32>
    %28 = vector.shape_cast %27 : vector<2x1x32xf32> to vector<2x32xf32>
    %29 = arith.addf %26, %28 : vector<2x32xf32>
    %cst_26 = arith.constant dense<0.000000e+00> : vector<2x32xf32>
    %30 = tpu.matmul %20, %1, %cst_26 {dimension_numbers = #tpu.dot_dimension_numbers<[1], [0], [0], [1], [0, 0, 1, 1], [], []>} : vector<2x32xf32>, vector<32x32xf32>, vector<2x32xf32> -> vector<2x32xf32>
    %31 = arith.addf %30, %29 : vector<2x32xf32>
    %cst_27 = arith.constant 8.000000e-01 : f32
    %32 = vector.broadcast %cst_27 : f32 to vector<2x32xf32>
    %33 = arith.mulf %32, %20 : vector<2x32xf32>
    %cst_28 = arith.constant 0.000000e+00 : f32
    %34 = vector.broadcast %cst_28 : f32 to vector<2x32xf32>
    %35 = arith.maximumf %31, %34 : vector<2x32xf32>
    %cst_29 = arith.constant 2.000000e-01 : f32
    %36 = vector.broadcast %cst_29 : f32 to vector<2x32xf32>
    %37 = arith.mulf %36, %35 : vector<2x32xf32>
    %38 = arith.addf %33, %37 : vector<2x32xf32>
    %c0_30 = arith.constant 0 : index
    %c2 = arith.constant 2 : index
    %c0_31 = arith.constant 0 : index
    %39 = vector.load %arg5[%c0_30, %c2, %c0_31] : memref<2x8x32xf32, #tpu.memory_space<vmem>>, vector<2x1x32xf32>
    %40 = vector.shape_cast %39 : vector<2x1x32xf32> to vector<2x32xf32>
    %41 = vector.shape_cast %38 : vector<2x32xf32> to vector<2x1x32xf32>
    tpu.vector_store %arg5[%c0_30, %c2, %c0_31], %41 {strides = array<i32>} : memref<2x8x32xf32, #tpu.memory_space<vmem>>, vector<2x1x32xf32>,
    %c0_32 = arith.constant 0 : index
    %c2_33 = arith.constant 2 : index
    %c0_34 = arith.constant 0 : index
    %42 = vector.load %arg1[%c0_32, %c2_33, %c0_34] : memref<2x8x6xf32, #tpu.memory_space<vmem>>, vector<2x1x6xf32>
    %43 = vector.shape_cast %42 : vector<2x1x6xf32> to vector<2x6xf32>
    %cst_35 = arith.constant dense<0.000000e+00> : vector<2x32xf32>
    %44 = tpu.matmul %43, %0, %cst_35 {dimension_numbers = #tpu.dot_dimension_numbers<[1], [0], [0], [1], [0, 0, 1, 1], [], []>} : vector<2x6xf32>, vector<6x32xf32>, vector<2x32xf32> -> vector<2x32xf32>
    %c0_36 = arith.constant 0 : index
    %c2_37 = arith.constant 2 : index
    %c0_38 = arith.constant 0 : index
    %45 = vector.load %arg2[%c0_36, %c2_37, %c0_38] : memref<2x8x32xf32, #tpu.memory_space<vmem>>, vector<2x1x32xf32>
    %46 = vector.shape_cast %45 : vector<2x1x32xf32> to vector<2x32xf32>
    %47 = arith.addf %44, %46 : vector<2x32xf32>
    %cst_39 = arith.constant dense<0.000000e+00> : vector<2x32xf32>
    %48 = tpu.matmul %38, %1, %cst_39 {dimension_numbers = #tpu.dot_dimension_numbers<[1], [0], [0], [1], [0, 0, 1, 1], [], []>} : vector<2x32xf32>, vector<32x32xf32>, vector<2x32xf32> -> vector<2x32xf32>
    %49 = arith.addf %48, %47 : vector<2x32xf32>
    %cst_40 = arith.constant 8.000000e-01 : f32
    %50 = vector.broadcast %cst_40 : f32 to vector<2x32xf32>
    %51 = arith.mulf %50, %38 : vector<2x32xf32>
    %cst_41 = arith.constant 0.000000e+00 : f32
    %52 = vector.broadcast %cst_41 : f32 to vector<2x32xf32>
    %53 = arith.maximumf %49, %52 : vector<2x32xf32>
    %cst_42 = arith.constant 2.000000e-01 : f32
    %54 = vector.broadcast %cst_42 : f32 to vector<2x32xf32>
    %55 = arith.mulf %54, %53 : vector<2x32xf32>
    %56 = arith.addf %51, %55 : vector<2x32xf32>
    %c0_43 = arith.constant 0 : index
    %c3 = arith.constant 3 : index
    %c0_44 = arith.constant 0 : index
    %57 = vector.load %arg5[%c0_43, %c3, %c0_44] : memref<2x8x32xf32, #tpu.memory_space<vmem>>, vector<2x1x32xf32>
    %58 = vector.shape_cast %57 : vector<2x1x32xf32> to vector<2x32xf32>
    %59 = vector.shape_cast %56 : vector<2x32xf32> to vector<2x1x32xf32>
    tpu.vector_store %arg5[%c0_43, %c3, %c0_44], %59 {strides = array<i32>} : memref<2x8x32xf32, #tpu.memory_space<vmem>>, vector<2x1x32xf32>,
    %c0_45 = arith.constant 0 : index
    %c3_46 = arith.constant 3 : index
    %c0_47 = arith.constant 0 : index
    %60 = vector.load %arg1[%c0_45, %c3_46, %c0_47] : memref<2x8x6xf32, #tpu.memory_space<vmem>>, vector<2x1x6xf32>
    %61 = vector.shape_cast %60 : vector<2x1x6xf32> to vector<2x6xf32>
    %cst_48 = arith.constant dense<0.000000e+00> : vector<2x32xf32>
    %62 = tpu.matmul %61, %0, %cst_48 {dimension_numbers = #tpu.dot_dimension_numbers<[1], [0], [0], [1], [0, 0, 1, 1], [], []>} : vector<2x6xf32>, vector<6x32xf32>, vector<2x32xf32> -> vector<2x32xf32>
    %c0_49 = arith.constant 0 : index
    %c3_50 = arith.constant 3 : index
    %c0_51 = arith.constant 0 : index
    %63 = vector.load %arg2[%c0_49, %c3_50, %c0_51] : memref<2x8x32xf32, #tpu.memory_space<vmem>>, vector<2x1x32xf32>
    %64 = vector.shape_cast %63 : vector<2x1x32xf32> to vector<2x32xf32>
    %65 = arith.addf %62, %64 : vector<2x32xf32>
    %cst_52 = arith.constant dense<0.000000e+00> : vector<2x32xf32>
    %66 = tpu.matmul %56, %1, %cst_52 {dimension_numbers = #tpu.dot_dimension_numbers<[1], [0], [0], [1], [0, 0, 1, 1], [], []>} : vector<2x32xf32>, vector<32x32xf32>, vector<2x32xf32> -> vector<2x32xf32>
    %67 = arith.addf %66, %65 : vector<2x32xf32>
    %cst_53 = arith.constant 8.000000e-01 : f32
    %68 = vector.broadcast %cst_53 : f32 to vector<2x32xf32>
    %69 = arith.mulf %68, %56 : vector<2x32xf32>
    %cst_54 = arith.constant 0.000000e+00 : f32
    %70 = vector.broadcast %cst_54 : f32 to vector<2x32xf32>
    %71 = arith.maximumf %67, %70 : vector<2x32xf32>
    %cst_55 = arith.constant 2.000000e-01 : f32
    %72 = vector.broadcast %cst_55 : f32 to vector<2x32xf32>
    %73 = arith.mulf %72, %71 : vector<2x32xf32>
    %74 = arith.addf %69, %73 : vector<2x32xf32>
    %c0_56 = arith.constant 0 : index
    %c4 = arith.constant 4 : index
    %c0_57 = arith.constant 0 : index
    %75 = vector.load %arg5[%c0_56, %c4, %c0_57] : memref<2x8x32xf32, #tpu.memory_space<vmem>>, vector<2x1x32xf32>
    %76 = vector.shape_cast %75 : vector<2x1x32xf32> to vector<2x32xf32>
    %77 = vector.shape_cast %74 : vector<2x32xf32> to vector<2x1x32xf32>
    tpu.vector_store %arg5[%c0_56, %c4, %c0_57], %77 {strides = array<i32>} : memref<2x8x32xf32, #tpu.memory_space<vmem>>, vector<2x1x32xf32>,
    %c0_58 = arith.constant 0 : index
    %c4_59 = arith.constant 4 : index
    %c0_60 = arith.constant 0 : index
    %78 = vector.load %arg1[%c0_58, %c4_59, %c0_60] : memref<2x8x6xf32, #tpu.memory_space<vmem>>, vector<2x1x6xf32>
    %79 = vector.shape_cast %78 : vector<2x1x6xf32> to vector<2x6xf32>
    %cst_61 = arith.constant dense<0.000000e+00> : vector<2x32xf32>
    %80 = tpu.matmul %79, %0, %cst_61 {dimension_numbers = #tpu.dot_dimension_numbers<[1], [0], [0], [1], [0, 0, 1, 1], [], []>} : vector<2x6xf32>, vector<6x32xf32>, vector<2x32xf32> -> vector<2x32xf32>
    %c0_62 = arith.constant 0 : index
    %c4_63 = arith.constant 4 : index
    %c0_64 = arith.constant 0 : index
    %81 = vector.load %arg2[%c0_62, %c4_63, %c0_64] : memref<2x8x32xf32, #tpu.memory_space<vmem>>, vector<2x1x32xf32>
    %82 = vector.shape_cast %81 : vector<2x1x32xf32> to vector<2x32xf32>
    %83 = arith.addf %80, %82 : vector<2x32xf32>
    %cst_65 = arith.constant dense<0.000000e+00> : vector<2x32xf32>
    %84 = tpu.matmul %74, %1, %cst_65 {dimension_numbers = #tpu.dot_dimension_numbers<[1], [0], [0], [1], [0, 0, 1, 1], [], []>} : vector<2x32xf32>, vector<32x32xf32>, vector<2x32xf32> -> vector<2x32xf32>
    %85 = arith.addf %84, %83 : vector<2x32xf32>
    %cst_66 = arith.constant 8.000000e-01 : f32
    %86 = vector.broadcast %cst_66 : f32 to vector<2x32xf32>
    %87 = arith.mulf %86, %74 : vector<2x32xf32>
    %cst_67 = arith.constant 0.000000e+00 : f32
    %88 = vector.broadcast %cst_67 : f32 to vector<2x32xf32>
    %89 = arith.maximumf %85, %88 : vector<2x32xf32>
    %cst_68 = arith.constant 2.000000e-01 : f32
    %90 = vector.broadcast %cst_68 : f32 to vector<2x32xf32>
    %91 = arith.mulf %90, %89 : vector<2x32xf32>
    %92 = arith.addf %87, %91 : vector<2x32xf32>
    %c0_69 = arith.constant 0 : index
    %c5 = arith.constant 5 : index
    %c0_70 = arith.constant 0 : index
    %93 = vector.load %arg5[%c0_69, %c5, %c0_70] : memref<2x8x32xf32, #tpu.memory_space<vmem>>, vector<2x1x32xf32>
    %94 = vector.shape_cast %93 : vector<2x1x32xf32> to vector<2x32xf32>
    %95 = vector.shape_cast %92 : vector<2x32xf32> to vector<2x1x32xf32>
    tpu.vector_store %arg5[%c0_69, %c5, %c0_70], %95 {strides = array<i32>} : memref<2x8x32xf32, #tpu.memory_space<vmem>>, vector<2x1x32xf32>,
    %c0_71 = arith.constant 0 : index
    %c5_72 = arith.constant 5 : index
    %c0_73 = arith.constant 0 : index
    %96 = vector.load %arg1[%c0_71, %c5_72, %c0_73] : memref<2x8x6xf32, #tpu.memory_space<vmem>>, vector<2x1x6xf32>
    %97 = vector.shape_cast %96 : vector<2x1x6xf32> to vector<2x6xf32>
    %cst_74 = arith.constant dense<0.000000e+00> : vector<2x32xf32>
    %98 = tpu.matmul %97, %0, %cst_74 {dimension_numbers = #tpu.dot_dimension_numbers<[1], [0], [0], [1], [0, 0, 1, 1], [], []>} : vector<2x6xf32>, vector<6x32xf32>, vector<2x32xf32> -> vector<2x32xf32>
    %c0_75 = arith.constant 0 : index
    %c5_76 = arith.constant 5 : index
    %c0_77 = arith.constant 0 : index
    %99 = vector.load %arg2[%c0_75, %c5_76, %c0_77] : memref<2x8x32xf32, #tpu.memory_space<vmem>>, vector<2x1x32xf32>
    %100 = vector.shape_cast %99 : vector<2x1x32xf32> to vector<2x32xf32>
    %101 = arith.addf %98, %100 : vector<2x32xf32>
    %cst_78 = arith.constant dense<0.000000e+00> : vector<2x32xf32>
    %102 = tpu.matmul %92, %1, %cst_78 {dimension_numbers = #tpu.dot_dimension_numbers<[1], [0], [0], [1], [0, 0, 1, 1], [], []>} : vector<2x32xf32>, vector<32x32xf32>, vector<2x32xf32> -> vector<2x32xf32>
    %103 = arith.addf %102, %101 : vector<2x32xf32>
    %cst_79 = arith.constant 8.000000e-01 : f32
    %104 = vector.broadcast %cst_79 : f32 to vector<2x32xf32>
    %105 = arith.mulf %104, %92 : vector<2x32xf32>
    %cst_80 = arith.constant 0.000000e+00 : f32
    %106 = vector.broadcast %cst_80 : f32 to vector<2x32xf32>
    %107 = arith.maximumf %103, %106 : vector<2x32xf32>
    %cst_81 = arith.constant 2.000000e-01 : f32
    %108 = vector.broadcast %cst_81 : f32 to vector<2x32xf32>
    %109 = arith.mulf %108, %107 : vector<2x32xf32>
    %110 = arith.addf %105, %109 : vector<2x32xf32>
    %c0_82 = arith.constant 0 : index
    %c6 = arith.constant 6 : index
    %c0_83 = arith.constant 0 : index
    %111 = vector.load %arg5[%c0_82, %c6, %c0_83] : memref<2x8x32xf32, #tpu.memory_space<vmem>>, vector<2x1x32xf32>
    %112 = vector.shape_cast %111 : vector<2x1x32xf32> to vector<2x32xf32>
    %113 = vector.shape_cast %110 : vector<2x32xf32> to vector<2x1x32xf32>
    tpu.vector_store %arg5[%c0_82, %c6, %c0_83], %113 {strides = array<i32>} : memref<2x8x32xf32, #tpu.memory_space<vmem>>, vector<2x1x32xf32>,
    %c0_84 = arith.constant 0 : index
    %c6_85 = arith.constant 6 : index
    %c0_86 = arith.constant 0 : index
    %114 = vector.load %arg1[%c0_84, %c6_85, %c0_86] : memref<2x8x6xf32, #tpu.memory_space<vmem>>, vector<2x1x6xf32>
    %115 = vector.shape_cast %114 : vector<2x1x6xf32> to vector<2x6xf32>
    %cst_87 = arith.constant dense<0.000000e+00> : vector<2x32xf32>
    %116 = tpu.matmul %115, %0, %cst_87 {dimension_numbers = #tpu.dot_dimension_numbers<[1], [0], [0], [1], [0, 0, 1, 1], [], []>} : vector<2x6xf32>, vector<6x32xf32>, vector<2x32xf32> -> vector<2x32xf32>
    %c0_88 = arith.constant 0 : index
    %c6_89 = arith.constant 6 : index
    %c0_90 = arith.constant 0 : index
    %117 = vector.load %arg2[%c0_88, %c6_89, %c0_90] : memref<2x8x32xf32, #tpu.memory_space<vmem>>, vector<2x1x32xf32>
    %118 = vector.shape_cast %117 : vector<2x1x32xf32> to vector<2x32xf32>
    %119 = arith.addf %116, %118 : vector<2x32xf32>
    %cst_91 = arith.constant dense<0.000000e+00> : vector<2x32xf32>
    %120 = tpu.matmul %110, %1, %cst_91 {dimension_numbers = #tpu.dot_dimension_numbers<[1], [0], [0], [1], [0, 0, 1, 1], [], []>} : vector<2x32xf32>, vector<32x32xf32>, vector<2x32xf32> -> vector<2x32xf32>
    %121 = arith.addf %120, %119 : vector<2x32xf32>
    %cst_92 = arith.constant 8.000000e-01 : f32
    %122 = vector.broadcast %cst_92 : f32 to vector<2x32xf32>
    %123 = arith.mulf %122, %110 : vector<2x32xf32>
    %cst_93 = arith.constant 0.000000e+00 : f32
    %124 = vector.broadcast %cst_93 : f32 to vector<2x32xf32>
    %125 = arith.maximumf %121, %124 : vector<2x32xf32>
    %cst_94 = arith.constant 2.000000e-01 : f32
    %126 = vector.broadcast %cst_94 : f32 to vector<2x32xf32>
    %127 = arith.mulf %126, %125 : vector<2x32xf32>
    %128 = arith.addf %123, %127 : vector<2x32xf32>
    %c0_95 = arith.constant 0 : index
    %c7 = arith.constant 7 : index
    %c0_96 = arith.constant 0 : index
    %129 = vector.load %arg5[%c0_95, %c7, %c0_96] : memref<2x8x32xf32, #tpu.memory_space<vmem>>, vector<2x1x32xf32>
    %130 = vector.shape_cast %129 : vector<2x1x32xf32> to vector<2x32xf32>
    %131 = vector.shape_cast %128 : vector<2x32xf32> to vector<2x1x32xf32>
    tpu.vector_store %arg5[%c0_95, %c7, %c0_96], %131 {strides = array<i32>} : memref<2x8x32xf32, #tpu.memory_space<vmem>>, vector<2x1x32xf32>,
    return
  }
  func.func @transform_0(%arg0: i32) -> (i32, i32, i32) {
    %c0_i32 = arith.constant 0 : i32
    %c0_i32_0 = arith.constant 0 : i32
    %c0_i32_1 = arith.constant 0 : i32
    %c0_i32_2 = arith.constant 0 : i32
    return %c0_i32, %c0_i32_0, %c0_i32_1 : i32, i32, i32
  }
  func.func @transform_1(%arg0: i32) -> (i32, i32, i32) {
    %c0_i32 = arith.constant 0 : i32
    %c0_i32_0 = arith.constant 0 : i32
    %c0_i32_1 = arith.constant 0 : i32
    %c0_i32_2 = arith.constant 0 : i32
    return %c0_i32, %c0_i32_0, %c0_i32_1 : i32, i32, i32
  }
  func.func @transform_2(%arg0: i32) -> (i32, i32) {
    %c0_i32 = arith.constant 0 : i32
    %c0_i32_0 = arith.constant 0 : i32
    %c0_i32_1 = arith.constant 0 : i32
    return %c0_i32, %c0_i32_0 : i32, i32
  }
  func.func @transform_3(%arg0: i32) -> (i32, i32) {
    %c0_i32 = arith.constant 0 : i32
    %c0_i32_0 = arith.constant 0 : i32
    %c0_i32_1 = arith.constant 0 : i32
    return %c0_i32, %c0_i32_0 : i32, i32
  }
  func.func @transform_4(%arg0: i32) -> (i32, i32, i32) {
    %c0_i32 = arith.constant 0 : i32
    %c0_i32_0 = arith.constant 0 : i32
    %c0_i32_1 = arith.constant 0 : i32
    %c0_i32_2 = arith.constant 0 : i32
    return %c0_i32, %c0_i32_0, %c0_i32_1 : i32, i32, i32
  }
}

</mosaic_0001>

<llo_original>
// kernel: rnn_forward.1
$region0: #{rnn_forward.1}
  #allocation0 [shape = 'u32[]', space=smem, size = 0x4, offset = 0x4, fixed_abs, tag = 'smem constant byte address 0x4 - core index']
  #allocation1 [shape = 'u32[144,128]{1,0:T(1,128)}', space=vmem, size = 0x12000, scoped, tag = 'internal scratch']
  %s0 = inlined_call_operand.vmem [shape: f32[2,8,6], index: 0, kind: input, shape index: {}]
  %s1 = inlined_call_operand.vmem [shape: f32[2,8,32], index: 1, kind: input, shape index: {}]
  %s2 = inlined_call_operand.vmem [shape: f32[6,32], index: 2, kind: input, shape index: {}]
  %s3 = inlined_call_operand.vmem [shape: f32[32,32], index: 3, kind: input, shape index: {}]
  %s4 = inlined_call_operand.hbm [shape: f32[2,8,32], index: 4, kind: output, shape index: {}]
  %s5 = sld [smem:[#allocation0]]
  $region26: #{rnn_forward.1} parent=0
    _
  %s7 = ssub.s32 1, %s5
  %s8 = scalar_select 0, %s7, %s5
  $region1: #{rnn_forward.1} parent=0
    #allocation2 [shape = 'u8[8192]{0}', space=vmem, size = 0x2000, scoped, tag = 'output window, operand 0, single buffered']
    #allocation3 [shape = 's32[1]{0}', space=sflag, size = 0x4, scoped, tag = 'scoped memory for rnn_forward.1']
    %9 = vsyncpa [#allocation3], 0
    // Predicated region
    $region2: #{rnn_forward.1} parent=1 // pred_check
      _
    $region3: #{rnn_forward.1} parent=1 // pred_check_branch
      %11 = sbr.rel (0) target = $region5
    $region4: #{rnn_forward.1} parent=1 // pred_region
      _
    $region5: #{rnn_forward.1} parent=1 // pred_fallthru
      _
    // Predicated region
    $region6: #{rnn_forward.1} parent=1 // pred_check
      _
    $region7: #{rnn_forward.1} parent=1 // pred_check_branch
      %13 = sbr.rel (0) target = $region9
    $region8: #{rnn_forward.1} parent=1 // pred_region
      _
    $region9: #{rnn_forward.1} parent=1 // pred_fallthru
      _
    // Predicated region
    $region10: #{rnn_forward.1} parent=1 // pred_check
      _
    $region11: #{rnn_forward.1} parent=1 // pred_check_branch
      %15 = sbr.rel (0) target = $region13
    $region12: #{rnn_forward.1} parent=1 // pred_region
      _
    $region13: #{rnn_forward.1} parent=1 // pred_fallthru
      _
    // Predicated region
    $region14: #{rnn_forward.1} parent=1 // pred_check
      _
    $region15: #{rnn_forward.1} parent=1 // pred_check_branch
      %17 = sbr.rel (0) target = $region17
    $region16: #{rnn_forward.1} parent=1 // pred_region
      _
    $region17: #{rnn_forward.1} parent=1 // pred_fallthru
      _
    %v18 = vld [vmem:[%s2] sm:$0x3f]
    %v19 = vld [vmem:[%s3] sm:$0xff]
    %v20 = vld [vmem:[%s3 + $0x8] sm:$0xff]
    %v21 = vld [vmem:[%s3 + $0x10] sm:$0xff]
    %v22 = vld [vmem:[%s3 + $0x18] sm:$0xff]
    %vm23 = vcmask 253952
    %24 = vst.msk [vmem:[#allocation2] sm:$0x1] %vm23, 0.0
    %25 = vst.msk [vmem:[#allocation2 + $0x8] sm:$0x1] %vm23, 0.0
    %v26 = vld [vmem:[%s0] sm:$0x1]
    %v27 = vld [vmem:[%s0 + $0x8] sm:$0x1]
    %v28 = vld [vmem:[%s1] sm:$0x1]
    %v29 = vld [vmem:[%s1 + $0x8] sm:$0x1]
    %v32 = vrot.slane %v27, 7
    %vm33 = vcmask 1041409
    %v34 = vsel %vm33, %v32, %v26
    %v37 = vrot.slane %v29, 7
    %v38 = vsel %vm33, %v37, %v28
    %vm40 = vcmask 48128
    %v41 = vsel %vm40, %v34, 0
    %vm43 = vcmask 1045504
    %v45 = vsel %vm43, %v18, 0
    %47 = vmatprep.subr.mxu0 0.0
    %48 = vmatpush1.msra.mxu0 %v45
    %49 = vmatprep.subr.mxu0 0.0
    %50 = vmatpush1.msra.mxu0 0.0
    %51 = vmatprep.subr.mxu0 0.0
    %52 = vmatpush1.msra.mxu0 0.0
    %53 = vmatprep.subr.mxu0 0.0
    %54 = vmatpush1.msra.mxu0 0.0
    %55 = vmatprep.subr.mxu0 0.0
    %56 = vmatpush1.msra.mxu0 0.0
    %57 = vmatprep.subr.mxu0 0.0
    %58 = vmatpush1.msra.mxu0 0.0
    %59 = vmatprep.subr.mxu0 0.0
    %60 = vmatpush1.msra.mxu0 0.0
    %61 = vmatprep.subr.mxu0 0.0
    %62 = vmatpush1.msra.mxu0 0.0
    %63 = vmatprep.subr.mxu0 0.0
    %64 = vmatpush1.msra.mxu0 0.0
    %65 = vmatprep.subr.mxu0 0.0
    %66 = vmatpush1.msra.mxu0 0.0
    %67 = vmatprep.subr.mxu0 0.0
    %68 = vmatpush1.msra.mxu0 0.0
    %69 = vmatprep.subr.mxu0 0.0
    %70 = vmatpush1.msra.mxu0 0.0
    %71 = vmatprep.subr.mxu0 0.0
    %72 = vmatpush1.msra.mxu0 0.0
    %73 = vmatprep.subr.mxu0 0.0
    %74 = vmatpush1.msra.mxu0 0.0
    %75 = vmatprep.subr.mxu0 0.0
    %76 = vmatpush1.msra.mxu0 0.0
    %77 = vmatprep.subr.mxu0 0.0
    %78 = vmatpush1.msra.mxu0 0.0
    %79 = vmatprep.subr.mxu0 0.0
    %80 = vmatpush1.msra.mxu0 0.0
    %81 = vmatprep.subr.mxu0 0.0
    %82 = vmatpush1.msra.mxu0 0.0
    %83 = vmatprep.subr.mxu0 0.0
    %84 = vmatpush1.msra.mxu0 0.0
    %85 = vmatprep.subr.mxu0 0.0
    %86 = vmatpush1.msra.mxu0 0.0
    %87 = vmatprep.subr.mxu0 0.0
    %88 = vmatpush1.msra.mxu0 0.0
    %89 = vmatprep.subr.mxu0 0.0
    %90 = vmatpush1.msra.mxu0 0.0
    %91 = vmatprep.subr.mxu0 0.0
    %92 = vmatpush1.msra.mxu0 0.0
    %93 = vmatprep.subr.mxu0 0.0
    %94 = vmatpush1.msra.mxu0 0.0
    %95 = vmatprep.subr.mxu0 0.0
    %96 = vmatpush1.msra.mxu0 0.0
    %97 = vmatprep.subr.mxu0 0.0
    %98 = vmatpush1.msra.mxu0 0.0
    %99 = vmatprep.subr.mxu0 0.0
    %100 = vmatpush1.msra.mxu0 0.0
    %101 = vmatprep.subr.mxu0 0.0
    %102 = vmatpush1.msra.mxu0 0.0
    %103 = vmatprep.subr.mxu0 0.0
    %104 = vmatpush1.msra.mxu0 0.0
    %105 = vmatprep.subr.mxu0 0.0
    %106 = vmatpush1.msra.mxu0 0.0
    %107 = vmatprep.subr.mxu0 0.0
    %108 = vmatpush1.msra.mxu0 0.0
    %109 = vmatprep.subr.mxu0 0.0
    %110 = vmatpush1.msra.mxu0 0.0
    %111 = vmatprep.mubr.f32.mxu0 0.0
    %112 = vmatmul.mubr.f32.gmra.mrb[0].mxu0 %v41
    %v113 = vpop.f32.mrb[0].mxu0
    %v114 = vadd.f32 %v38, %v113
    %v115 = vpop.f32.mrb[0].mxu0
    %116 = vdwg.mxu0
    %vm117 = vcmask 261120
    %v119 = vsel %vm117, 0.0, 0
    %121 = vmatprep.subr.mxu0 0.0
    %122 = vmatpush1.msra.mxu0 %v19
    %123 = vmatprep.subr.mxu0 0.0
    %124 = vmatpush1.msra.mxu0 %v20
    %125 = vmatprep.subr.mxu0 0.0
    %126 = vmatpush1.msra.mxu0 %v21
    %127 = vmatprep.subr.mxu0 0.0
    %128 = vmatpush1.msra.mxu0 %v22
    %129 = vmatprep.subr.mxu0 0.0
    %130 = vmatpush1.msra.mxu0 0.0
    %131 = vmatprep.subr.mxu0 0.0
    %132 = vmatpush1.msra.mxu0 0.0
    %133 = vmatprep.subr.mxu0 0.0
    %134 = vmatpush1.msra.mxu0 0.0
    %135 = vmatprep.subr.mxu0 0.0
    %136 = vmatpush1.msra.mxu0 0.0
    %137 = vmatprep.subr.mxu0 0.0
    %138 = vmatpush1.msra.mxu0 0.0
    %139 = vmatprep.subr.mxu0 0.0
    %140 = vmatpush1.msra.mxu0 0.0
    %141 = vmatprep.subr.mxu0 0.0
    %142 = vmatpush1.msra.mxu0 0.0
    %143 = vmatprep.subr.mxu0 0.0
    %144 = vmatpush1.msra.mxu0 0.0
    %145 = vmatprep.subr.mxu0 0.0
    %146 = vmatpush1.msra.mxu0 0.0
    %147 = vmatprep.subr.mxu0 0.0
    %148 = vmatpush1.msra.mxu0 0.0
    %149 = vmatprep.subr.mxu0 0.0
    %150 = vmatpush1.msra.mxu0 0.0
    %151 = vmatprep.subr.mxu0 0.0
    %152 = vmatpush1.msra.mxu0 0.0
    %153 = vmatprep.subr.mxu0 0.0
    %154 = vmatpush1.msra.mxu0 0.0
    %155 = vmatprep.subr.mxu0 0.0
    %156 = vmatpush1.msra.mxu0 0.0
    %157 = vmatprep.subr.mxu0 0.0
    %158 = vmatpush1.msra.mxu0 0.0
    %159 = vmatprep.subr.mxu0 0.0
    %160 = vmatpush1.msra.mxu0 0.0
    %161 = vmatprep.subr.mxu0 0.0
    %162 = vmatpush1.msra.mxu0 0.0
    %163 = vmatprep.subr.mxu0 0.0
    %164 = vmatpush1.msra.mxu0 0.0
    %165 = vmatprep.subr.mxu0 0.0
    %166 = vmatpush1.msra.mxu0 0.0
    %167 = vmatprep.subr.mxu0 0.0
    %168 = vmatpush1.msra.mxu0 0.0
    %169 = vmatprep.subr.mxu0 0.0
    %170 = vmatpush1.msra.mxu0 0.0
    %171 = vmatprep.subr.mxu0 0.0
    %172 = vmatpush1.msra.mxu0 0.0
    %173 = vmatprep.subr.mxu0 0.0
    %174 = vmatpush1.msra.mxu0 0.0
    %175 = vmatprep.subr.mxu0 0.0
    %176 = vmatpush1.msra.mxu0 0.0
    %177 = vmatprep.subr.mxu0 0.0
    %178 = vmatpush1.msra.mxu0 0.0
    %179 = vmatprep.subr.mxu0 0.0
    %180 = vmatpush1.msra.mxu0 0.0
    %181 = vmatprep.subr.mxu0 0.0
    %182 = vmatpush1.msra.mxu0 0.0
    %183 = vmatprep.subr.mxu0 0.0
    %184 = vmatpush1.msra.mxu0 0.0
    %185 = vmatprep.mubr.f32.mxu0 0.0
    %186 = vmatmul.mubr.f32.gmra.mrb[0].mxu0 %v119
    %v187 = vpop.f32.mrb[0].mxu0
    %v188 = vadd.f32 %v114, %v187
    %v189 = vpop.f32.mrb[0].mxu0
    %190 = vdwg.mxu0
    %v191 = vmax.f32 %v188, 0.0
    %v192 = vmul.f32 %v191, 0.2
    %v193 = vadd.f32 %v192, 0.0
    %v196 = vunpack.c.l.s4 1966171168
    %v197 = vunpack.c.0.s8 %v196
    %v198 = vlaneseq
    %v199 = vshrl.u32 %v198, 7
    %v200 = vsub.s32 %v197, %v199
    %v201 = vrot.slane %v193, %v200
    %v202 = vcombine.high %v201, %v201
    %v204 = vunpack.c.l.s4 1966171168
    %v205 = vunpack.c.0.s8 %v204
    %v206 = vlaneseq
    %v207 = vshrl.u32 %v206, 7
    %v208 = vsub.s32 %v205, %v207
    %v209 = vrot.slane %v201, %v208
    %v211 = vunpack.c.l.s4 1966171168
    %v212 = vunpack.c.0.s8 %v211
    %v213 = vlaneseq
    %v214 = vshrl.u32 %v213, 7
    %v215 = vsub.s32 %v212, %v214
    %v216 = vrot.slane %v202, %v215
    %219 = vst.msk [vmem:[#allocation2 + $0x1] sm:$0x1] %vm23, %v209
    %220 = vst.msk [vmem:[#allocation2 + $0x9] sm:$0x1] %vm23, %v216
    %v221 = vld [vmem:[%s0 + $0x1] sm:$0x1]
    %v222 = vld [vmem:[%s0 + $0x9] sm:$0x1]
    %v223 = vld [vmem:[%s1 + $0x1] sm:$0x1]
    %v224 = vld [vmem:[%s1 + $0x9] sm:$0x1]
    %v227 = vrot.slane %v222, 7
    %v228 = vsel %vm33, %v227, %v221
    %v231 = vrot.slane %v224, 7
    %v232 = vsel %vm33, %v231, %v223
    %v234 = vsel %vm40, %v228, 0
    %236 = vmatprep.subr.mxu0 0.0
    %237 = vmatpush1.msra.mxu0 %v45
    %238 = vmatprep.subr.mxu0 0.0
    %239 = vmatpush1.msra.mxu0 0.0
    %240 = vmatprep.subr.mxu0 0.0
    %241 = vmatpush1.msra.mxu0 0.0
    %242 = vmatprep.subr.mxu0 0.0
    %243 = vmatpush1.msra.mxu0 0.0
    %244 = vmatprep.subr.mxu0 0.0
    %245 = vmatpush1.msra.mxu0 0.0
    %246 = vmatprep.subr.mxu0 0.0
    %247 = vmatpush1.msra.mxu0 0.0
    %248 = vmatprep.subr.mxu0 0.0
    %249 = vmatpush1.msra.mxu0 0.0
    %250 = vmatprep.subr.mxu0 0.0
    %251 = vmatpush1.msra.mxu0 0.0
    %252 = vmatprep.subr.mxu0 0.0
    %253 = vmatpush1.msra.mxu0 0.0
    %254 = vmatprep.subr.mxu0 0.0
    %255 = vmatpush1.msra.mxu0 0.0
    %256 = vmatprep.subr.mxu0 0.0
    %257 = vmatpush1.msra.mxu0 0.0
    %258 = vmatprep.subr.mxu0 0.0
    %259 = vmatpush1.msra.mxu0 0.0
    %260 = vmatprep.subr.mxu0 0.0
    %261 = vmatpush1.msra.mxu0 0.0
    %262 = vmatprep.subr.mxu0 0.0
    %263 = vmatpush1.msra.mxu0 0.0
    %264 = vmatprep.subr.mxu0 0.0
    %265 = vmatpush1.msra.mxu0 0.0
    %266 = vmatprep.subr.mxu0 0.0
    %267 = vmatpush1.msra.mxu0 0.0
    %268 = vmatprep.subr.mxu0 0.0
    %269 = vmatpush1.msra.mxu0 0.0
    %270 = vmatprep.subr.mxu0 0.0
    %271 = vmatpush1.msra.mxu0 0.0
    %272 = vmatprep.subr.mxu0 0.0
    %273 = vmatpush1.msra.mxu0 0.0
    %274 = vmatprep.subr.mxu0 0.0
    %275 = vmatpush1.msra.mxu0 0.0
    %276 = vmatprep.subr.mxu0 0.0
    %277 = vmatpush1.msra.mxu0 0.0
    %278 = vmatprep.subr.mxu0 0.0
    %279 = vmatpush1.msra.mxu0 0.0
    %280 = vmatprep.subr.mxu0 0.0
    %281 = vmatpush1.msra.mxu0 0.0
    %282 = vmatprep.subr.mxu0 0.0
    %283 = vmatpush1.msra.mxu0 0.0
    %284 = vmatprep.subr.mxu0 0.0
    %285 = vmatpush1.msra.mxu0 0.0
    %286 = vmatprep.subr.mxu0 0.0
    %287 = vmatpush1.msra.mxu0 0.0
    %288 = vmatprep.subr.mxu0 0.0
    %289 = vmatpush1.msra.mxu0 0.0
    %290 = vmatprep.subr.mxu0 0.0
    %291 = vmatpush1.msra.mxu0 0.0
    %292 = vmatprep.subr.mxu0 0.0
    %293 = vmatpush1.msra.mxu0 0.0
    %294 = vmatprep.subr.mxu0 0.0
    %295 = vmatpush1.msra.mxu0 0.0
    %296 = vmatprep.subr.mxu0 0.0
    %297 = vmatpush1.msra.mxu0 0.0
    %298 = vmatprep.subr.mxu0 0.0
    %299 = vmatpush1.msra.mxu0 0.0
    %300 = vmatprep.mubr.f32.mxu0 0.0
    %301 = vmatmul.mubr.f32.gmra.mrb[0].mxu0 %v234
    %v302 = vpop.f32.mrb[0].mxu0
    %v303 = vadd.f32 %v232, %v302
    %v304 = vpop.f32.mrb[0].mxu0
    %305 = vdwg.mxu0
    %v306 = vsel %vm117, %v193, 0
    %308 = vmatprep.subr.mxu0 0.0
    %309 = vmatpush1.msra.mxu0 %v19
    %310 = vmatprep.subr.mxu0 0.0
    %311 = vmatpush1.msra.mxu0 %v20
    %312 = vmatprep.subr.mxu0 0.0
    %313 = vmatpush1.msra.mxu0 %v21
    %314 = vmatprep.subr.mxu0 0.0
    %315 = vmatpush1.msra.mxu0 %v22
    %316 = vmatprep.subr.mxu0 0.0
    %317 = vmatpush1.msra.mxu0 0.0
    %318 = vmatprep.subr.mxu0 0.0
    %319 = vmatpush1.msra.mxu0 0.0
    %320 = vmatprep.subr.mxu0 0.0
    %321 = vmatpush1.msra.mxu0 0.0
    %322 = vmatprep.subr.mxu0 0.0
    %323 = vmatpush1.msra.mxu0 0.0
    %324 = vmatprep.subr.mxu0 0.0
    %325 = vmatpush1.msra.mxu0 0.0
    %326 = vmatprep.subr.mxu0 0.0
    %327 = vmatpush1.msra.mxu0 0.0
    %328 = vmatprep.subr.mxu0 0.0
    %329 = vmatpush1.msra.mxu0 0.0
    %330 = vmatprep.subr.mxu0 0.0
    %331 = vmatpush1.msra.mxu0 0.0
    %332 = vmatprep.subr.mxu0 0.0
    %333 = vmatpush1.msra.mxu0 0.0
    %334 = vmatprep.subr.mxu0 0.0
    %335 = vmatpush1.msra.mxu0 0.0
    %336 = vmatprep.subr.mxu0 0.0
    %337 = vmatpush1.msra.mxu0 0.0
    %338 = vmatprep.subr.mxu0 0.0
    %339 = vmatpush1.msra.mxu0 0.0
    %340 = vmatprep.subr.mxu0 0.0
    %341 = vmatpush1.msra.mxu0 0.0
    %342 = vmatprep.subr.mxu0 0.0
    %343 = vmatpush1.msra.mxu0 0.0
    %344 = vmatprep.subr.mxu0 0.0
    %345 = vmatpush1.msra.mxu0 0.0
    %346 = vmatprep.subr.mxu0 0.0
    %347 = vmatpush1.msra.mxu0 0.0
    %348 = vmatprep.subr.mxu0 0.0
    %349 = vmatpush1.msra.mxu0 0.0
    %350 = vmatprep.subr.mxu0 0.0
    %351 = vmatpush1.msra.mxu0 0.0
    %352 = vmatprep.subr.mxu0 0.0
    %353 = vmatpush1.msra.mxu0 0.0
    %354 = vmatprep.subr.mxu0 0.0
    %355 = vmatpush1.msra.mxu0 0.0
    %356 = vmatprep.subr.mxu0 0.0
    %357 = vmatpush1.msra.mxu0 0.0
    %358 = vmatprep.subr.mxu0 0.0
    %359 = vmatpush1.msra.mxu0 0.0
    %360 = vmatprep.subr.mxu0 0.0
    %361 = vmatpush1.msra.mxu0 0.0
    %362 = vmatprep.subr.mxu0 0.0
    %363 = vmatpush1.msra.mxu0 0.0
    %364 = vmatprep.subr.mxu0 0.0
    %365 = vmatpush1.msra.mxu0 0.0
    %366 = vmatprep.subr.mxu0 0.0
    %367 = vmatpush1.msra.mxu0 0.0
    %368 = vmatprep.subr.mxu0 0.0
    %369 = vmatpush1.msra.mxu0 0.0
    %370 = vmatprep.subr.mxu0 0.0
    %371 = vmatpush1.msra.mxu0 0.0
    %372 = vmatprep.mubr.f32.mxu0 0.0
    %373 = vmatmul.mubr.f32.gmra.mrb[0].mxu0 %v306
    %v374 = vpop.f32.mrb[0].mxu0
    %v375 = vadd.f32 %v303, %v374
    %v376 = vpop.f32.mrb[0].mxu0
    %377 = vdwg.mxu0
    %v378 = vmul.f32 %v193, 0.8
    %v379 = vmax.f32 %v375, 0.0
    %v380 = vmul.f32 %v379, 0.2
    %v381 = vadd.f32 %v378, %v380
    %v384 = vunpack.c.l.s4 1966171168
    %v385 = vunpack.c.0.s8 %v384
    %v386 = vlaneseq
    %v387 = vshrl.u32 %v386, 7
    %v388 = vsub.s32 %v385, %v387
    %v389 = vrot.slane %v381, %v388
    %v390 = vcombine.high %v389, %v389
    %v392 = vunpack.c.l.s4 1966171168
    %v393 = vunpack.c.0.s8 %v392
    %v394 = vlaneseq
    %v395 = vshrl.u32 %v394, 7
    %v396 = vsub.s32 %v393, %v395
    %v397 = vrot.slane %v389, %v396
    %v399 = vunpack.c.l.s4 1966171168
    %v400 = vunpack.c.0.s8 %v399
    %v401 = vlaneseq
    %v402 = vshrl.u32 %v401, 7
    %v403 = vsub.s32 %v400, %v402
    %v404 = vrot.slane %v390, %v403
    %407 = vst.msk [vmem:[#allocation2 + $0x2] sm:$0x1] %vm23, %v397
    %408 = vst.msk [vmem:[#allocation2 + $0xa] sm:$0x1] %vm23, %v404
    %v409 = vld [vmem:[%s0 + $0x2] sm:$0x1]
    %v410 = vld [vmem:[%s0 + $0xa] sm:$0x1]
    %v411 = vld [vmem:[%s1 + $0x2] sm:$0x1]
    %v412 = vld [vmem:[%s1 + $0xa] sm:$0x1]
    %v415 = vrot.slane %v410, 7
    %v416 = vsel %vm33, %v415, %v409
    %v419 = vrot.slane %v412, 7
    %v420 = vsel %vm33, %v419, %v411
    %v422 = vsel %vm40, %v416, 0
    %424 = vmatprep.subr.mxu0 0.0
    %425 = vmatpush1.msra.mxu0 %v45
    %426 = vmatprep.subr.mxu0 0.0
    %427 = vmatpush1.msra.mxu0 0.0
    %428 = vmatprep.subr.mxu0 0.0
    %429 = vmatpush1.msra.mxu0 0.0
    %430 = vmatprep.subr.mxu0 0.0
    %431 = vmatpush1.msra.mxu0 0.0
    %432 = vmatprep.subr.mxu0 0.0
    %433 = vmatpush1.msra.mxu0 0.0
    %434 = vmatprep.subr.mxu0 0.0
    %435 = vmatpush1.msra.mxu0 0.0
    %436 = vmatprep.subr.mxu0 0.0
    %437 = vmatpush1.msra.mxu0 0.0
    %438 = vmatprep.subr.mxu0 0.0
    %439 = vmatpush1.msra.mxu0 0.0
    %440 = vmatprep.subr.mxu0 0.0
    %441 = vmatpush1.msra.mxu0 0.0
    %442 = vmatprep.subr.mxu0 0.0
    %443 = vmatpush1.msra.mxu0 0.0
    %444 = vmatprep.subr.mxu0 0.0
    %445 = vmatpush1.msra.mxu0 0.0
    %446 = vmatprep.subr.mxu0 0.0
    %447 = vmatpush1.msra.mxu0 0.0
    %448 = vmatprep.subr.mxu0 0.0
    %449 = vmatpush1.msra.mxu0 0.0
    %450 = vmatprep.subr.mxu0 0.0
    %451 = vmatpush1.msra.mxu0 0.0
    %452 = vmatprep.subr.mxu0 0.0
    %453 = vmatpush1.msra.mxu0 0.0
    %454 = vmatprep.subr.mxu0 0.0
    %455 = vmatpush1.msra.mxu0 0.0
    %456 = vmatprep.subr.mxu0 0.0
    %457 = vmatpush1.msra.mxu0 0.0
    %458 = vmatprep.subr.mxu0 0.0
    %459 = vmatpush1.msra.mxu0 0.0
    %460 = vmatprep.subr.mxu0 0.0
    %461 = vmatpush1.msra.mxu0 0.0
    %462 = vmatprep.subr.mxu0 0.0
    %463 = vmatpush1.msra.mxu0 0.0
    %464 = vmatprep.subr.mxu0 0.0
    %465 = vmatpush1.msra.mxu0 0.0
    %466 = vmatprep.subr.mxu0 0.0
    %467 = vmatpush1.msra.mxu0 0.0
    %468 = vmatprep.subr.mxu0 0.0
    %469 = vmatpush1.msra.mxu0 0.0
    %470 = vmatprep.subr.mxu0 0.0
    %471 = vmatpush1.msra.mxu0 0.0
    %472 = vmatprep.subr.mxu0 0.0
    %473 = vmatpush1.msra.mxu0 0.0
    %474 = vmatprep.subr.mxu0 0.0
    %475 = vmatpush1.msra.mxu0 0.0
    %476 = vmatprep.subr.mxu0 0.0
    %477 = vmatpush1.msra.mxu0 0.0
    %478 = vmatprep.subr.mxu0 0.0
    %479 = vmatpush1.msra.mxu0 0.0
    %480 = vmatprep.subr.mxu0 0.0
    %481 = vmatpush1.msra.mxu0 0.0
    %482 = vmatprep.subr.mxu0 0.0
    %483 = vmatpush1.msra.mxu0 0.0
    %484 = vmatprep.subr.mxu0 0.0
    %485 = vmatpush1.msra.mxu0 0.0
    %486 = vmatprep.subr.mxu0 0.0
    %487 = vmatpush1.msra.mxu0 0.0
    %488 = vmatprep.mubr.f32.mxu0 0.0
    %489 = vmatmul.mubr.f32.gmra.mrb[0].mxu0 %v422
    %v490 = vpop.f32.mrb[0].mxu0
    %v491 = vadd.f32 %v420, %v490
    %v492 = vpop.f32.mrb[0].mxu0
    %493 = vdwg.mxu0
    %v494 = vsel %vm117, %v381, 0
    %496 = vmatprep.subr.mxu0 0.0
    %497 = vmatpush1.msra.mxu0 %v19
    %498 = vmatprep.subr.mxu0 0.0
    %499 = vmatpush1.msra.mxu0 %v20
    %500 = vmatprep.subr.mxu0 0.0
    %501 = vmatpush1.msra.mxu0 %v21
    %502 = vmatprep.subr.mxu0 0.0
    %503 = vmatpush1.msra.mxu0 %v22
    %504 = vmatprep.subr.mxu0 0.0
    %505 = vmatpush1.msra.mxu0 0.0
    %506 = vmatprep.subr.mxu0 0.0
    %507 = vmatpush1.msra.mxu0 0.0
    %508 = vmatprep.subr.mxu0 0.0
    %509 = vmatpush1.msra.mxu0 0.0
    %510 = vmatprep.subr.mxu0 0.0
    %511 = vmatpush1.msra.mxu0 0.0
    %512 = vmatprep.subr.mxu0 0.0
    %513 = vmatpush1.msra.mxu0 0.0
    %514 = vmatprep.subr.mxu0 0.0
    %515 = vmatpush1.msra.mxu0 0.0
    %516 = vmatprep.subr.mxu0 0.0
    %517 = vmatpush1.msra.mxu0 0.0
    %518 = vmatprep.subr.mxu0 0.0
    %519 = vmatpush1.msra.mxu0 0.0
    %520 = vmatprep.subr.mxu0 0.0
    %521 = vmatpush1.msra.mxu0 0.0
    %522 = vmatprep.subr.mxu0 0.0
    %523 = vmatpush1.msra.mxu0 0.0
    %524 = vmatprep.subr.mxu0 0.0
    %525 = vmatpush1.msra.mxu0 0.0
    %526 = vmatprep.subr.mxu0 0.0
    %527 = vmatpush1.msra.mxu0 0.0
    %528 = vmatprep.subr.mxu0 0.0
    %529 = vmatpush1.msra.mxu0 0.0
    %530 = vmatprep.subr.mxu0 0.0
    %531 = vmatpush1.msra.mxu0 0.0
    %532 = vmatprep.subr.mxu0 0.0
    %533 = vmatpush1.msra.mxu0 0.0
    %534 = vmatprep.subr.mxu0 0.0
    %535 = vmatpush1.msra.mxu0 0.0
    %536 = vmatprep.subr.mxu0 0.0
    %537 = vmatpush1.msra.mxu0 0.0
    %538 = vmatprep.subr.mxu0 0.0
    %539 = vmatpush1.msra.mxu0 0.0
    %540 = vmatprep.subr.mxu0 0.0
    %541 = vmatpush1.msra.mxu0 0.0
    %542 = vmatprep.subr.mxu0 0.0
    %543 = vmatpush1.msra.mxu0 0.0
    %544 = vmatprep.subr.mxu0 0.0
    %545 = vmatpush1.msra.mxu0 0.0
    %546 = vmatprep.subr.mxu0 0.0
    %547 = vmatpush1.msra.mxu0 0.0
    %548 = vmatprep.subr.mxu0 0.0
    %549 = vmatpush1.msra.mxu0 0.0
    %550 = vmatprep.subr.mxu0 0.0
    %551 = vmatpush1.msra.mxu0 0.0
    %552 = vmatprep.subr.mxu0 0.0
    %553 = vmatpush1.msra.mxu0 0.0
    %554 = vmatprep.subr.mxu0 0.0
    %555 = vmatpush1.msra.mxu0 0.0
    %556 = vmatprep.subr.mxu0 0.0
    %557 = vmatpush1.msra.mxu0 0.0
    %558 = vmatprep.subr.mxu0 0.0
    %559 = vmatpush1.msra.mxu0 0.0
    %560 = vmatprep.mubr.f32.mxu0 0.0
    %561 = vmatmul.mubr.f32.gmra.mrb[0].mxu0 %v494
    %v562 = vpop.f32.mrb[0].mxu0
    %v563 = vadd.f32 %v491, %v562
    %v564 = vpop.f32.mrb[0].mxu0
    %565 = vdwg.mxu0
    %v566 = vmul.f32 %v381, 0.8
    %v567 = vmax.f32 %v563, 0.0
    %v568 = vmul.f32 %v567, 0.2
    %v569 = vadd.f32 %v566, %v568
    %v572 = vunpack.c.l.s4 1966171168
    %v573 = vunpack.c.0.s8 %v572
    %v574 = vlaneseq
    %v575 = vshrl.u32 %v574, 7
    %v576 = vsub.s32 %v573, %v575
    %v577 = vrot.slane %v569, %v576
    %v578 = vcombine.high %v577, %v577
    %v580 = vunpack.c.l.s4 1966171168
    %v581 = vunpack.c.0.s8 %v580
    %v582 = vlaneseq
    %v583 = vshrl.u32 %v582, 7
    %v584 = vsub.s32 %v581, %v583
    %v585 = vrot.slane %v577, %v584
    %v587 = vunpack.c.l.s4 1966171168
    %v588 = vunpack.c.0.s8 %v587
    %v589 = vlaneseq
    %v590 = vshrl.u32 %v589, 7
    %v591 = vsub.s32 %v588, %v590
    %v592 = vrot.slane %v578, %v591
    %595 = vst.msk [vmem:[#allocation2 + $0x3] sm:$0x1] %vm23, %v585
    %596 = vst.msk [vmem:[#allocation2 + $0xb] sm:$0x1] %vm23, %v592
    %v597 = vld [vmem:[%s0 + $0x3] sm:$0x1]
    %v598 = vld [vmem:[%s0 + $0xb] sm:$0x1]
    %v599 = vld [vmem:[%s1 + $0x3] sm:$0x1]
    %v600 = vld [vmem:[%s1 + $0xb] sm:$0x1]
    %v603 = vrot.slane %v598, 7
    %v604 = vsel %vm33, %v603, %v597
    %v607 = vrot.slane %v600, 7
    %v608 = vsel %vm33, %v607, %v599
    %v610 = vsel %vm40, %v604, 0
    %612 = vmatprep.subr.mxu0 0.0
    %613 = vmatpush1.msra.mxu0 %v45
    %614 = vmatprep.subr.mxu0 0.0
    %615 = vmatpush1.msra.mxu0 0.0
    %616 = vmatprep.subr.mxu0 0.0
    %617 = vmatpush1.msra.mxu0 0.0
    %618 = vmatprep.subr.mxu0 0.0
    %619 = vmatpush1.msra.mxu0 0.0
    %620 = vmatprep.subr.mxu0 0.0
    %621 = vmatpush1.msra.mxu0 0.0
    %622 = vmatprep.subr.mxu0 0.0
    %623 = vmatpush1.msra.mxu0 0.0
    %624 = vmatprep.subr.mxu0 0.0
    %625 = vmatpush1.msra.mxu0 0.0
    %626 = vmatprep.subr.mxu0 0.0
    %627 = vmatpush1.msra.mxu0 0.0
    %628 = vmatprep.subr.mxu0 0.0
    %629 = vmatpush1.msra.mxu0 0.0
    %630 = vmatprep.subr.mxu0 0.0
    %631 = vmatpush1.msra.mxu0 0.0
    %632 = vmatprep.subr.mxu0 0.0
    %633 = vmatpush1.msra.mxu0 0.0
    %634 = vmatprep.subr.mxu0 0.0
    %635 = vmatpush1.msra.mxu0 0.0
    %636 = vmatprep.subr.mxu0 0.0
    %637 = vmatpush1.msra.mxu0 0.0
    %638 = vmatprep.subr.mxu0 0.0
    %639 = vmatpush1.msra.mxu0 0.0
    %640 = vmatprep.subr.mxu0 0.0
    %641 = vmatpush1.msra.mxu0 0.0
    %642 = vmatprep.subr.mxu0 0.0
    %643 = vmatpush1.msra.mxu0 0.0
    %644 = vmatprep.subr.mxu0 0.0
    %645 = vmatpush1.msra.mxu0 0.0
    %646 = vmatprep.subr.mxu0 0.0
    %647 = vmatpush1.msra.mxu0 0.0
    %648 = vmatprep.subr.mxu0 0.0
    %649 = vmatpush1.msra.mxu0 0.0
    %650 = vmatprep.subr.mxu0 0.0
    %651 = vmatpush1.msra.mxu0 0.0
    %652 = vmatprep.subr.mxu0 0.0
    %653 = vmatpush1.msra.mxu0 0.0
    %654 = vmatprep.subr.mxu0 0.0
    %655 = vmatpush1.msra.mxu0 0.0
    %656 = vmatprep.subr.mxu0 0.0
    %657 = vmatpush1.msra.mxu0 0.0
    %658 = vmatprep.subr.mxu0 0.0
    %659 = vmatpush1.msra.mxu0 0.0
    %660 = vmatprep.subr.mxu0 0.0
    %661 = vmatpush1.msra.mxu0 0.0
    %662 = vmatprep.subr.mxu0 0.0
    %663 = vmatpush1.msra.mxu0 0.0
    %664 = vmatprep.subr.mxu0 0.0
    %665 = vmatpush1.msra.mxu0 0.0
    %666 = vmatprep.subr.mxu0 0.0
    %667 = vmatpush1.msra.mxu0 0.0
    %668 = vmatprep.subr.mxu0 0.0
    %669 = vmatpush1.msra.mxu0 0.0
    %670 = vmatprep.subr.mxu0 0.0
    %671 = vmatpush1.msra.mxu0 0.0
    %672 = vmatprep.subr.mxu0 0.0
    %673 = vmatpush1.msra.mxu0 0.0
    %674 = vmatprep.subr.mxu0 0.0
    %675 = vmatpush1.msra.mxu0 0.0
    %676 = vmatprep.mubr.f32.mxu0 0.0
    %677 = vmatmul.mubr.f32.gmra.mrb[0].mxu0 %v610
    %v678 = vpop.f32.mrb[0].mxu0
    %v679 = vadd.f32 %v608, %v678
    %v680 = vpop.f32.mrb[0].mxu0
    %681 = vdwg.mxu0
    %v682 = vsel %vm117, %v569, 0
    %684 = vmatprep.subr.mxu0 0.0
    %685 = vmatpush1.msra.mxu0 %v19
    %686 = vmatprep.subr.mxu0 0.0
    %687 = vmatpush1.msra.mxu0 %v20
    %688 = vmatprep.subr.mxu0 0.0
    %689 = vmatpush1.msra.mxu0 %v21
    %690 = vmatprep.subr.mxu0 0.0
    %691 = vmatpush1.msra.mxu0 %v22
    %692 = vmatprep.subr.mxu0 0.0
    %693 = vmatpush1.msra.mxu0 0.0
    %694 = vmatprep.subr.mxu0 0.0
    %695 = vmatpush1.msra.mxu0 0.0
    %696 = vmatprep.subr.mxu0 0.0
    %697 = vmatpush1.msra.mxu0 0.0
    %698 = vmatprep.subr.mxu0 0.0
    %699 = vmatpush1.msra.mxu0 0.0
    %700 = vmatprep.subr.mxu0 0.0
    %701 = vmatpush1.msra.mxu0 0.0
    %702 = vmatprep.subr.mxu0 0.0
    %703 = vmatpush1.msra.mxu0 0.0
    %704 = vmatprep.subr.mxu0 0.0
    %705 = vmatpush1.msra.mxu0 0.0
    %706 = vmatprep.subr.mxu0 0.0
    %707 = vmatpush1.msra.mxu0 0.0
    %708 = vmatprep.subr.mxu0 0.0
    %709 = vmatpush1.msra.mxu0 0.0
    %710 = vmatprep.subr.mxu0 0.0
    %711 = vmatpush1.msra.mxu0 0.0
    %712 = vmatprep.subr.mxu0 0.0
    %713 = vmatpush1.msra.mxu0 0.0
    %714 = vmatprep.subr.mxu0 0.0
    %715 = vmatpush1.msra.mxu0 0.0
    %716 = vmatprep.subr.mxu0 0.0
    %717 = vmatpush1.msra.mxu0 0.0
    %718 = vmatprep.subr.mxu0 0.0
    %719 = vmatpush1.msra.mxu0 0.0
    %720 = vmatprep.subr.mxu0 0.0
    %721 = vmatpush1.msra.mxu0 0.0
    %722 = vmatprep.subr.mxu0 0.0
    %723 = vmatpush1.msra.mxu0 0.0
    %724 = vmatprep.subr.mxu0 0.0
    %725 = vmatpush1.msra.mxu0 0.0
    %726 = vmatprep.subr.mxu0 0.0
    %727 = vmatpush1.msra.mxu0 0.0
    %728 = vmatprep.subr.mxu0 0.0
    %729 = vmatpush1.msra.mxu0 0.0
    %730 = vmatprep.subr.mxu0 0.0
    %731 = vmatpush1.msra.mxu0 0.0
    %732 = vmatprep.subr.mxu0 0.0
    %733 = vmatpush1.msra.mxu0 0.0
    %734 = vmatprep.subr.mxu0 0.0
    %735 = vmatpush1.msra.mxu0 0.0
    %736 = vmatprep.subr.mxu0 0.0
    %737 = vmatpush1.msra.mxu0 0.0
    %738 = vmatprep.subr.mxu0 0.0
    %739 = vmatpush1.msra.mxu0 0.0
    %740 = vmatprep.subr.mxu0 0.0
    %741 = vmatpush1.msra.mxu0 0.0
    %742 = vmatprep.subr.mxu0 0.0
    %743 = vmatpush1.msra.mxu0 0.0
    %744 = vmatprep.subr.mxu0 0.0
    %745 = vmatpush1.msra.mxu0 0.0
    %746 = vmatprep.subr.mxu0 0.0
    %747 = vmatpush1.msra.mxu0 0.0
    %748 = vmatprep.mubr.f32.mxu0 0.0
    %749 = vmatmul.mubr.f32.gmra.mrb[0].mxu0 %v682
    %v750 = vpop.f32.mrb[0].mxu0
    %v751 = vadd.f32 %v679, %v750
    %v752 = vpop.f32.mrb[0].mxu0
    %753 = vdwg.mxu0
    %v754 = vmul.f32 %v569, 0.8
    %v755 = vmax.f32 %v751, 0.0
    %v756 = vmul.f32 %v755, 0.2
    %v757 = vadd.f32 %v754, %v756
    %v760 = vunpack.c.l.s4 1966171168
    %v761 = vunpack.c.0.s8 %v760
    %v762 = vlaneseq
    %v763 = vshrl.u32 %v762, 7
    %v764 = vsub.s32 %v761, %v763
    %v765 = vrot.slane %v757, %v764
    %v766 = vcombine.high %v765, %v765
    %v768 = vunpack.c.l.s4 1966171168
    %v769 = vunpack.c.0.s8 %v768
    %v770 = vlaneseq
    %v771 = vshrl.u32 %v770, 7
    %v772 = vsub.s32 %v769, %v771
    %v773 = vrot.slane %v765, %v772
    %v775 = vunpack.c.l.s4 1966171168
    %v776 = vunpack.c.0.s8 %v775
    %v777 = vlaneseq
    %v778 = vshrl.u32 %v777, 7
    %v779 = vsub.s32 %v776, %v778
    %v780 = vrot.slane %v766, %v779
    %783 = vst.msk [vmem:[#allocation2 + $0x4] sm:$0x1] %vm23, %v773
    %784 = vst.msk [vmem:[#allocation2 + $0xc] sm:$0x1] %vm23, %v780
    %v785 = vld [vmem:[%s0 + $0x4] sm:$0x1]
    %v786 = vld [vmem:[%s0 + $0xc] sm:$0x1]
    %v787 = vld [vmem:[%s1 + $0x4] sm:$0x1]
    %v788 = vld [vmem:[%s1 + $0xc] sm:$0x1]
    %v791 = vrot.slane %v786, 7
    %v792 = vsel %vm33, %v791, %v785
    %v795 = vrot.slane %v788, 7
    %v796 = vsel %vm33, %v795, %v787
    %v798 = vsel %vm40, %v792, 0
    %800 = vmatprep.subr.mxu0 0.0
    %801 = vmatpush1.msra.mxu0 %v45
    %802 = vmatprep.subr.mxu0 0.0
    %803 = vmatpush1.msra.mxu0 0.0
    %804 = vmatprep.subr.mxu0 0.0
    %805 = vmatpush1.msra.mxu0 0.0
    %806 = vmatprep.subr.mxu0 0.0
    %807 = vmatpush1.msra.mxu0 0.0
    %808 = vmatprep.subr.mxu0 0.0
    %809 = vmatpush1.msra.mxu0 0.0
    %810 = vmatprep.subr.mxu0 0.0
    %811 = vmatpush1.msra.mxu0 0.0
    %812 = vmatprep.subr.mxu0 0.0
    %813 = vmatpush1.msra.mxu0 0.0
    %814 = vmatprep.subr.mxu0 0.0
    %815 = vmatpush1.msra.mxu0 0.0
    %816 = vmatprep.subr.mxu0 0.0
    %817 = vmatpush1.msra.mxu0 0.0
    %818 = vmatprep.subr.mxu0 0.0
    %819 = vmatpush1.msra.mxu0 0.0
    %820 = vmatprep.subr.mxu0 0.0
    %821 = vmatpush1.msra.mxu0 0.0
    %822 = vmatprep.subr.mxu0 0.0
    %823 = vmatpush1.msra.mxu0 0.0
    %824 = vmatprep.subr.mxu0 0.0
    %825 = vmatpush1.msra.mxu0 0.0
    %826 = vmatprep.subr.mxu0 0.0
    %827 = vmatpush1.msra.mxu0 0.0
    %828 = vmatprep.subr.mxu0 0.0
    %829 = vmatpush1.msra.mxu0 0.0
    %830 = vmatprep.subr.mxu0 0.0
    %831 = vmatpush1.msra.mxu0 0.0
    %832 = vmatprep.subr.mxu0 0.0
    %833 = vmatpush1.msra.mxu0 0.0
    %834 = vmatprep.subr.mxu0 0.0
    %835 = vmatpush1.msra.mxu0 0.0
    %836 = vmatprep.subr.mxu0 0.0
    %837 = vmatpush1.msra.mxu0 0.0
    %838 = vmatprep.subr.mxu0 0.0
    %839 = vmatpush1.msra.mxu0 0.0
    %840 = vmatprep.subr.mxu0 0.0
    %841 = vmatpush1.msra.mxu0 0.0
    %842 = vmatprep.subr.mxu0 0.0
    %843 = vmatpush1.msra.mxu0 0.0
    %844 = vmatprep.subr.mxu0 0.0
    %845 = vmatpush1.msra.mxu0 0.0
    %846 = vmatprep.subr.mxu0 0.0
    %847 = vmatpush1.msra.mxu0 0.0
    %848 = vmatprep.subr.mxu0 0.0
    %849 = vmatpush1.msra.mxu0 0.0
    %850 = vmatprep.subr.mxu0 0.0
    %851 = vmatpush1.msra.mxu0 0.0
    %852 = vmatprep.subr.mxu0 0.0
    %853 = vmatpush1.msra.mxu0 0.0
    %854 = vmatprep.subr.mxu0 0.0
    %855 = vmatpush1.msra.mxu0 0.0
    %856 = vmatprep.subr.mxu0 0.0
    %857 = vmatpush1.msra.mxu0 0.0
    %858 = vmatprep.subr.mxu0 0.0
    %859 = vmatpush1.msra.mxu0 0.0
    %860 = vmatprep.subr.mxu0 0.0
    %861 = vmatpush1.msra.mxu0 0.0
    %862 = vmatprep.subr.mxu0 0.0
    %863 = vmatpush1.msra.mxu0 0.0
    %864 = vmatprep.mubr.f32.mxu0 0.0
    %865 = vmatmul.mubr.f32.gmra.mrb[0].mxu0 %v798
    %v866 = vpop.f32.mrb[0].mxu0
    %v867 = vadd.f32 %v796, %v866
    %v868 = vpop.f32.mrb[0].mxu0
    %869 = vdwg.mxu0
    %v870 = vsel %vm117, %v757, 0
    %872 = vmatprep.subr.mxu0 0.0
    %873 = vmatpush1.msra.mxu0 %v19
    %874 = vmatprep.subr.mxu0 0.0
    %875 = vmatpush1.msra.mxu0 %v20
    %876 = vmatprep.subr.mxu0 0.0
    %877 = vmatpush1.msra.mxu0 %v21
    %878 = vmatprep.subr.mxu0 0.0
    %879 = vmatpush1.msra.mxu0 %v22
    %880 = vmatprep.subr.mxu0 0.0
    %881 = vmatpush1.msra.mxu0 0.0
    %882 = vmatprep.subr.mxu0 0.0
    %883 = vmatpush1.msra.mxu0 0.0
    %884 = vmatprep.subr.mxu0 0.0
    %885 = vmatpush1.msra.mxu0 0.0
    %886 = vmatprep.subr.mxu0 0.0
    %887 = vmatpush1.msra.mxu0 0.0
    %888 = vmatprep.subr.mxu0 0.0
    %889 = vmatpush1.msra.mxu0 0.0
    %890 = vmatprep.subr.mxu0 0.0
    %891 = vmatpush1.msra.mxu0 0.0
    %892 = vmatprep.subr.mxu0 0.0
    %893 = vmatpush1.msra.mxu0 0.0
    %894 = vmatprep.subr.mxu0 0.0
    %895 = vmatpush1.msra.mxu0 0.0
    %896 = vmatprep.subr.mxu0 0.0
    %897 = vmatpush1.msra.mxu0 0.0
    %898 = vmatprep.subr.mxu0 0.0
    %899 = vmatpush1.msra.mxu0 0.0
    %900 = vmatprep.subr.mxu0 0.0
    %901 = vmatpush1.msra.mxu0 0.0
    %902 = vmatprep.subr.mxu0 0.0
    %903 = vmatpush1.msra.mxu0 0.0
    %904 = vmatprep.subr.mxu0 0.0
    %905 = vmatpush1.msra.mxu0 0.0
    %906 = vmatprep.subr.mxu0 0.0
    %907 = vmatpush1.msra.mxu0 0.0
    %908 = vmatprep.subr.mxu0 0.0
    %909 = vmatpush1.msra.mxu0 0.0
    %910 = vmatprep.subr.mxu0 0.0
    %911 = vmatpush1.msra.mxu0 0.0
    %912 = vmatprep.subr.mxu0 0.0
    %913 = vmatpush1.msra.mxu0 0.0
    %914 = vmatprep.subr.mxu0 0.0
    %915 = vmatpush1.msra.mxu0 0.0
    %916 = vmatprep.subr.mxu0 0.0
    %917 = vmatpush1.msra.mxu0 0.0
    %918 = vmatprep.subr.mxu0 0.0
    %919 = vmatpush1.msra.mxu0 0.0
    %920 = vmatprep.subr.mxu0 0.0
    %921 = vmatpush1.msra.mxu0 0.0
    %922 = vmatprep.subr.mxu0 0.0
    %923 = vmatpush1.msra.mxu0 0.0
    %924 = vmatprep.subr.mxu0 0.0
    %925 = vmatpush1.msra.mxu0 0.0
    %926 = vmatprep.subr.mxu0 0.0
    %927 = vmatpush1.msra.mxu0 0.0
    %928 = vmatprep.subr.mxu0 0.0
    %929 = vmatpush1.msra.mxu0 0.0
    %930 = vmatprep.subr.mxu0 0.0
    %931 = vmatpush1.msra.mxu0 0.0
    %932 = vmatprep.subr.mxu0 0.0
    %933 = vmatpush1.msra.mxu0 0.0
    %934 = vmatprep.subr.mxu0 0.0
    %935 = vmatpush1.msra.mxu0 0.0
    %936 = vmatprep.mubr.f32.mxu0 0.0
    %937 = vmatmul.mubr.f32.gmra.mrb[0].mxu0 %v870
    %v938 = vpop.f32.mrb[0].mxu0
    %v939 = vadd.f32 %v867, %v938
    %v940 = vpop.f32.mrb[0].mxu0
    %941 = vdwg.mxu0
    %v942 = vmul.f32 %v757, 0.8
    %v943 = vmax.f32 %v939, 0.0
    %v944 = vmul.f32 %v943, 0.2
    %v945 = vadd.f32 %v942, %v944
    %v948 = vunpack.c.l.s4 1966171168
    %v949 = vunpack.c.0.s8 %v948
    %v950 = vlaneseq
    %v951 = vshrl.u32 %v950, 7
    %v952 = vsub.s32 %v949, %v951
    %v953 = vrot.slane %v945, %v952
    %v954 = vcombine.high %v953, %v953
    %v956 = vunpack.c.l.s4 1966171168
    %v957 = vunpack.c.0.s8 %v956
    %v958 = vlaneseq
    %v959 = vshrl.u32 %v958, 7
    %v960 = vsub.s32 %v957, %v959
    %v961 = vrot.slane %v953, %v960
    %v963 = vunpack.c.l.s4 1966171168
    %v964 = vunpack.c.0.s8 %v963
    %v965 = vlaneseq
    %v966 = vshrl.u32 %v965, 7
    %v967 = vsub.s32 %v964, %v966
    %v968 = vrot.slane %v954, %v967
    %971 = vst.msk [vmem:[#allocation2 + $0x5] sm:$0x1] %vm23, %v961
    %972 = vst.msk [vmem:[#allocation2 + $0xd] sm:$0x1] %vm23, %v968
    %v973 = vld [vmem:[%s0 + $0x5] sm:$0x1]
    %v974 = vld [vmem:[%s0 + $0xd] sm:$0x1]
    %v975 = vld [vmem:[%s1 + $0x5] sm:$0x1]
    %v976 = vld [vmem:[%s1 + $0xd] sm:$0x1]
    %v979 = vrot.slane %v974, 7
    %v980 = vsel %vm33, %v979, %v973
    %v983 = vrot.slane %v976, 7
    %v984 = vsel %vm33, %v983, %v975
    %v986 = vsel %vm40, %v980, 0
    %988 = vmatprep.subr.mxu0 0.0
    %989 = vmatpush1.msra.mxu0 %v45
    %990 = vmatprep.subr.mxu0 0.0
    %991 = vmatpush1.msra.mxu0 0.0
    %992 = vmatprep.subr.mxu0 0.0
    %993 = vmatpush1.msra.mxu0 0.0
    %994 = vmatprep.subr.mxu0 0.0
    %995 = vmatpush1.msra.mxu0 0.0
    %996 = vmatprep.subr.mxu0 0.0
    %997 = vmatpush1.msra.mxu0 0.0
    %998 = vmatprep.subr.mxu0 0.0
    %999 = vmatpush1.msra.mxu0 0.0
    %1000 = vmatprep.subr.mxu0 0.0
    %1001 = vmatpush1.msra.mxu0 0.0
    %1002 = vmatprep.subr.mxu0 0.0
    %1003 = vmatpush1.msra.mxu0 0.0
    %1004 = vmatprep.subr.mxu0 0.0
    %1005 = vmatpush1.msra.mxu0 0.0
    %1006 = vmatprep.subr.mxu0 0.0
    %1007 = vmatpush1.msra.mxu0 0.0
    %1008 = vmatprep.subr.mxu0 0.0
    %1009 = vmatpush1.msra.mxu0 0.0
    %1010 = vmatprep.subr.mxu0 0.0
    %1011 = vmatpush1.msra.mxu0 0.0
    %1012 = vmatprep.subr.mxu0 0.0
    %1013 = vmatpush1.msra.mxu0 0.0
    %1014 = vmatprep.subr.mxu0 0.0
    %1015 = vmatpush1.msra.mxu0 0.0
    %1016 = vmatprep.subr.mxu0 0.0
    %1017 = vmatpush1.msra.mxu0 0.0
    %1018 = vmatprep.subr.mxu0 0.0
    %1019 = vmatpush1.msra.mxu0 0.0
    %1020 = vmatprep.subr.mxu0 0.0
    %1021 = vmatpush1.msra.mxu0 0.0
    %1022 = vmatprep.subr.mxu0 0.0
    %1023 = vmatpush1.msra.mxu0 0.0
    %1024 = vmatprep.subr.mxu0 0.0
    %1025 = vmatpush1.msra.mxu0 0.0
    %1026 = vmatprep.subr.mxu0 0.0
    %1027 = vmatpush1.msra.mxu0 0.0
    %1028 = vmatprep.subr.mxu0 0.0
    %1029 = vmatpush1.msra.mxu0 0.0
    %1030 = vmatprep.subr.mxu0 0.0
    %1031 = vmatpush1.msra.mxu0 0.0
    %1032 = vmatprep.subr.mxu0 0.0
    %1033 = vmatpush1.msra.mxu0 0.0
    %1034 = vmatprep.subr.mxu0 0.0
    %1035 = vmatpush1.msra.mxu0 0.0
    %1036 = vmatprep.subr.mxu0 0.0
    %1037 = vmatpush1.msra.mxu0 0.0
    %1038 = vmatprep.subr.mxu0 0.0
    %1039 = vmatpush1.msra.mxu0 0.0
    %1040 = vmatprep.subr.mxu0 0.0
    %1041 = vmatpush1.msra.mxu0 0.0
    %1042 = vmatprep.subr.mxu0 0.0
    %1043 = vmatpush1.msra.mxu0 0.0
    %1044 = vmatprep.subr.mxu0 0.0
    %1045 = vmatpush1.msra.mxu0 0.0
    %1046 = vmatprep.subr.mxu0 0.0
    %1047 = vmatpush1.msra.mxu0 0.0
    %1048 = vmatprep.subr.mxu0 0.0
    %1049 = vmatpush1.msra.mxu0 0.0
    %1050 = vmatprep.subr.mxu0 0.0
    %1051 = vmatpush1.msra.mxu0 0.0
    %1052 = vmatprep.mubr.f32.mxu0 0.0
    %1053 = vmatmul.mubr.f32.gmra.mrb[0].mxu0 %v986
    %v1054 = vpop.f32.mrb[0].mxu0
    %v1055 = vadd.f32 %v984, %v1054
    %v1056 = vpop.f32.mrb[0].mxu0
    %1057 = vdwg.mxu0
    %v1058 = vsel %vm117, %v945, 0
    %1060 = vmatprep.subr.mxu0 0.0
    %1061 = vmatpush1.msra.mxu0 %v19
    %1062 = vmatprep.subr.mxu0 0.0
    %1063 = vmatpush1.msra.mxu0 %v20
    %1064 = vmatprep.subr.mxu0 0.0
    %1065 = vmatpush1.msra.mxu0 %v21
    %1066 = vmatprep.subr.mxu0 0.0
    %1067 = vmatpush1.msra.mxu0 %v22
    %1068 = vmatprep.subr.mxu0 0.0
    %1069 = vmatpush1.msra.mxu0 0.0
    %1070 = vmatprep.subr.mxu0 0.0
    %1071 = vmatpush1.msra.mxu0 0.0
    %1072 = vmatprep.subr.mxu0 0.0
    %1073 = vmatpush1.msra.mxu0 0.0
    %1074 = vmatprep.subr.mxu0 0.0
    %1075 = vmatpush1.msra.mxu0 0.0
    %1076 = vmatprep.subr.mxu0 0.0
    %1077 = vmatpush1.msra.mxu0 0.0
    %1078 = vmatprep.subr.mxu0 0.0
    %1079 = vmatpush1.msra.mxu0 0.0
    %1080 = vmatprep.subr.mxu0 0.0
    %1081 = vmatpush1.msra.mxu0 0.0
    %1082 = vmatprep.subr.mxu0 0.0
    %1083 = vmatpush1.msra.mxu0 0.0
    %1084 = vmatprep.subr.mxu0 0.0
    %1085 = vmatpush1.msra.mxu0 0.0
    %1086 = vmatprep.subr.mxu0 0.0
    %1087 = vmatpush1.msra.mxu0 0.0
    %1088 = vmatprep.subr.mxu0 0.0
    %1089 = vmatpush1.msra.mxu0 0.0
    %1090 = vmatprep.subr.mxu0 0.0
    %1091 = vmatpush1.msra.mxu0 0.0
    %1092 = vmatprep.subr.mxu0 0.0
    %1093 = vmatpush1.msra.mxu0 0.0
    %1094 = vmatprep.subr.mxu0 0.0
    %1095 = vmatpush1.msra.mxu0 0.0
    %1096 = vmatprep.subr.mxu0 0.0
    %1097 = vmatpush1.msra.mxu0 0.0
    %1098 = vmatprep.subr.mxu0 0.0
    %1099 = vmatpush1.msra.mxu0 0.0
    %1100 = vmatprep.subr.mxu0 0.0
    %1101 = vmatpush1.msra.mxu0 0.0
    %1102 = vmatprep.subr.mxu0 0.0
    %1103 = vmatpush1.msra.mxu0 0.0
    %1104 = vmatprep.subr.mxu0 0.0
    %1105 = vmatpush1.msra.mxu0 0.0
    %1106 = vmatprep.subr.mxu0 0.0
    %1107 = vmatpush1.msra.mxu0 0.0
    %1108 = vmatprep.subr.mxu0 0.0
    %1109 = vmatpush1.msra.mxu0 0.0
    %1110 = vmatprep.subr.mxu0 0.0
    %1111 = vmatpush1.msra.mxu0 0.0
    %1112 = vmatprep.subr.mxu0 0.0
    %1113 = vmatpush1.msra.mxu0 0.0
    %1114 = vmatprep.subr.mxu0 0.0
    %1115 = vmatpush1.msra.mxu0 0.0
    %1116 = vmatprep.subr.mxu0 0.0
    %1117 = vmatpush1.msra.mxu0 0.0
    %1118 = vmatprep.subr.mxu0 0.0
    %1119 = vmatpush1.msra.mxu0 0.0
    %1120 = vmatprep.subr.mxu0 0.0
    %1121 = vmatpush1.msra.mxu0 0.0
    %1122 = vmatprep.subr.mxu0 0.0
    %1123 = vmatpush1.msra.mxu0 0.0
    %1124 = vmatprep.mubr.f32.mxu0 0.0
    %1125 = vmatmul.mubr.f32.gmra.mrb[0].mxu0 %v1058
    %v1126 = vpop.f32.mrb[0].mxu0
    %v1127 = vadd.f32 %v1055, %v1126
    %v1128 = vpop.f32.mrb[0].mxu0
    %1129 = vdwg.mxu0
    %v1130 = vmul.f32 %v945, 0.8
    %v1131 = vmax.f32 %v1127, 0.0
    %v1132 = vmul.f32 %v1131, 0.2
    %v1133 = vadd.f32 %v1130, %v1132
    %v1136 = vunpack.c.l.s4 1966171168
    %v1137 = vunpack.c.0.s8 %v1136
    %v1138 = vlaneseq
    %v1139 = vshrl.u32 %v1138, 7
    %v1140 = vsub.s32 %v1137, %v1139
    %v1141 = vrot.slane %v1133, %v1140
    %v1142 = vcombine.high %v1141, %v1141
    %v1144 = vunpack.c.l.s4 1966171168
    %v1145 = vunpack.c.0.s8 %v1144
    %v1146 = vlaneseq
    %v1147 = vshrl.u32 %v1146, 7
    %v1148 = vsub.s32 %v1145, %v1147
    %v1149 = vrot.slane %v1141, %v1148
    %v1151 = vunpack.c.l.s4 1966171168
    %v1152 = vunpack.c.0.s8 %v1151
    %v1153 = vlaneseq
    %v1154 = vshrl.u32 %v1153, 7
    %v1155 = vsub.s32 %v1152, %v1154
    %v1156 = vrot.slane %v1142, %v1155
    %1159 = vst.msk [vmem:[#allocation2 + $0x6] sm:$0x1] %vm23, %v1149
    %1160 = vst.msk [vmem:[#allocation2 + $0xe] sm:$0x1] %vm23, %v1156
    %v1161 = vld [vmem:[%s0 + $0x6] sm:$0x1]
    %v1162 = vld [vmem:[%s0 + $0xe] sm:$0x1]
    %v1163 = vld [vmem:[%s1 + $0x6] sm:$0x1]
    %v1164 = vld [vmem:[%s1 + $0xe] sm:$0x1]
    %v1167 = vrot.slane %v1162, 7
    %v1168 = vsel %vm33, %v1167, %v1161
    %v1171 = vrot.slane %v1164, 7
    %v1172 = vsel %vm33, %v1171, %v1163
    %v1174 = vsel %vm40, %v1168, 0
    %1176 = vmatprep.subr.mxu0 0.0
    %1177 = vmatpush1.msra.mxu0 %v45
    %1178 = vmatprep.subr.mxu0 0.0
    %1179 = vmatpush1.msra.mxu0 0.0
    %1180 = vmatprep.subr.mxu0 0.0
    %1181 = vmatpush1.msra.mxu0 0.0
    %1182 = vmatprep.subr.mxu0 0.0
    %1183 = vmatpush1.msra.mxu0 0.0
    %1184 = vmatprep.subr.mxu0 0.0
    %1185 = vmatpush1.msra.mxu0 0.0
    %1186 = vmatprep.subr.mxu0 0.0
    %1187 = vmatpush1.msra.mxu0 0.0
    %1188 = vmatprep.subr.mxu0 0.0
    %1189 = vmatpush1.msra.mxu0 0.0
    %1190 = vmatprep.subr.mxu0 0.0
    %1191 = vmatpush1.msra.mxu0 0.0
    %1192 = vmatprep.subr.mxu0 0.0
    %1193 = vmatpush1.msra.mxu0 0.0
    %1194 = vmatprep.subr.mxu0 0.0
    %1195 = vmatpush1.msra.mxu0 0.0
    %1196 = vmatprep.subr.mxu0 0.0
    %1197 = vmatpush1.msra.mxu0 0.0
    %1198 = vmatprep.subr.mxu0 0.0
    %1199 = vmatpush1.msra.mxu0 0.0
    %1200 = vmatprep.subr.mxu0 0.0
    %1201 = vmatpush1.msra.mxu0 0.0
    %1202 = vmatprep.subr.mxu0 0.0
    %1203 = vmatpush1.msra.mxu0 0.0
    %1204 = vmatprep.subr.mxu0 0.0
    %1205 = vmatpush1.msra.mxu0 0.0
    %1206 = vmatprep.subr.mxu0 0.0
    %1207 = vmatpush1.msra.mxu0 0.0
    %1208 = vmatprep.subr.mxu0 0.0
    %1209 = vmatpush1.msra.mxu0 0.0
    %1210 = vmatprep.subr.mxu0 0.0
    %1211 = vmatpush1.msra.mxu0 0.0
    %1212 = vmatprep.subr.mxu0 0.0
    %1213 = vmatpush1.msra.mxu0 0.0
    %1214 = vmatprep.subr.mxu0 0.0
    %1215 = vmatpush1.msra.mxu0 0.0
    %1216 = vmatprep.subr.mxu0 0.0
    %1217 = vmatpush1.msra.mxu0 0.0
    %1218 = vmatprep.subr.mxu0 0.0
    %1219 = vmatpush1.msra.mxu0 0.0
    %1220 = vmatprep.subr.mxu0 0.0
    %1221 = vmatpush1.msra.mxu0 0.0
    %1222 = vmatprep.subr.mxu0 0.0
    %1223 = vmatpush1.msra.mxu0 0.0
    %1224 = vmatprep.subr.mxu0 0.0
    %1225 = vmatpush1.msra.mxu0 0.0
    %1226 = vmatprep.subr.mxu0 0.0
    %1227 = vmatpush1.msra.mxu0 0.0
    %1228 = vmatprep.subr.mxu0 0.0
    %1229 = vmatpush1.msra.mxu0 0.0
    %1230 = vmatprep.subr.mxu0 0.0
    %1231 = vmatpush1.msra.mxu0 0.0
    %1232 = vmatprep.subr.mxu0 0.0
    %1233 = vmatpush1.msra.mxu0 0.0
    %1234 = vmatprep.subr.mxu0 0.0
    %1235 = vmatpush1.msra.mxu0 0.0
    %1236 = vmatprep.subr.mxu0 0.0
    %1237 = vmatpush1.msra.mxu0 0.0
    %1238 = vmatprep.subr.mxu0 0.0
    %1239 = vmatpush1.msra.mxu0 0.0
    %1240 = vmatprep.mubr.f32.mxu0 0.0
    %1241 = vmatmul.mubr.f32.gmra.mrb[0].mxu0 %v1174
    %v1242 = vpop.f32.mrb[0].mxu0
    %v1243 = vadd.f32 %v1172, %v1242
    %v1244 = vpop.f32.mrb[0].mxu0
    %1245 = vdwg.mxu0
    %v1246 = vsel %vm117, %v1133, 0
    %1248 = vmatprep.subr.mxu0 0.0
    %1249 = vmatpush1.msra.mxu0 %v19
    %1250 = vmatprep.subr.mxu0 0.0
    %1251 = vmatpush1.msra.mxu0 %v20
    %1252 = vmatprep.subr.mxu0 0.0
    %1253 = vmatpush1.msra.mxu0 %v21
    %1254 = vmatprep.subr.mxu0 0.0
    %1255 = vmatpush1.msra.mxu0 %v22
    %1256 = vmatprep.subr.mxu0 0.0
    %1257 = vmatpush1.msra.mxu0 0.0
    %1258 = vmatprep.subr.mxu0 0.0
    %1259 = vmatpush1.msra.mxu0 0.0
    %1260 = vmatprep.subr.mxu0 0.0
    %1261 = vmatpush1.msra.mxu0 0.0
    %1262 = vmatprep.subr.mxu0 0.0
    %1263 = vmatpush1.msra.mxu0 0.0
    %1264 = vmatprep.subr.mxu0 0.0
    %1265 = vmatpush1.msra.mxu0 0.0
    %1266 = vmatprep.subr.mxu0 0.0
    %1267 = vmatpush1.msra.mxu0 0.0
    %1268 = vmatprep.subr.mxu0 0.0
    %1269 = vmatpush1.msra.mxu0 0.0
    %1270 = vmatprep.subr.mxu0 0.0
    %1271 = vmatpush1.msra.mxu0 0.0
    %1272 = vmatprep.subr.mxu0 0.0
    %1273 = vmatpush1.msra.mxu0 0.0
    %1274 = vmatprep.subr.mxu0 0.0
    %1275 = vmatpush1.msra.mxu0 0.0
    %1276 = vmatprep.subr.mxu0 0.0
    %1277 = vmatpush1.msra.mxu0 0.0
    %1278 = vmatprep.subr.mxu0 0.0
    %1279 = vmatpush1.msra.mxu0 0.0
    %1280 = vmatprep.subr.mxu0 0.0
    %1281 = vmatpush1.msra.mxu0 0.0
    %1282 = vmatprep.subr.mxu0 0.0
    %1283 = vmatpush1.msra.mxu0 0.0
    %1284 = vmatprep.subr.mxu0 0.0
    %1285 = vmatpush1.msra.mxu0 0.0
    %1286 = vmatprep.subr.mxu0 0.0
    %1287 = vmatpush1.msra.mxu0 0.0
    %1288 = vmatprep.subr.mxu0 0.0
    %1289 = vmatpush1.msra.mxu0 0.0
    %1290 = vmatprep.subr.mxu0 0.0
    %1291 = vmatpush1.msra.mxu0 0.0
    %1292 = vmatprep.subr.mxu0 0.0
    %1293 = vmatpush1.msra.mxu0 0.0
    %1294 = vmatprep.subr.mxu0 0.0
    %1295 = vmatpush1.msra.mxu0 0.0
    %1296 = vmatprep.subr.mxu0 0.0
    %1297 = vmatpush1.msra.mxu0 0.0
    %1298 = vmatprep.subr.mxu0 0.0
    %1299 = vmatpush1.msra.mxu0 0.0
    %1300 = vmatprep.subr.mxu0 0.0
    %1301 = vmatpush1.msra.mxu0 0.0
    %1302 = vmatprep.subr.mxu0 0.0
    %1303 = vmatpush1.msra.mxu0 0.0
    %1304 = vmatprep.subr.mxu0 0.0
    %1305 = vmatpush1.msra.mxu0 0.0
    %1306 = vmatprep.subr.mxu0 0.0
    %1307 = vmatpush1.msra.mxu0 0.0
    %1308 = vmatprep.subr.mxu0 0.0
    %1309 = vmatpush1.msra.mxu0 0.0
    %1310 = vmatprep.subr.mxu0 0.0
    %1311 = vmatpush1.msra.mxu0 0.0
    %1312 = vmatprep.mubr.f32.mxu0 0.0
    %1313 = vmatmul.mubr.f32.gmra.mrb[0].mxu0 %v1246
    %v1314 = vpop.f32.mrb[0].mxu0
    %v1315 = vadd.f32 %v1243, %v1314
    %v1316 = vpop.f32.mrb[0].mxu0
    %1317 = vdwg.mxu0
    %v1318 = vmul.f32 %v1133, 0.8
    %v1319 = vmax.f32 %v1315, 0.0
    %v1320 = vmul.f32 %v1319, 0.2
    %v1321 = vadd.f32 %v1318, %v1320
    %v1324 = vunpack.c.l.s4 1966171168
    %v1325 = vunpack.c.0.s8 %v1324
    %v1326 = vlaneseq
    %v1327 = vshrl.u32 %v1326, 7
    %v1328 = vsub.s32 %v1325, %v1327
    %v1329 = vrot.slane %v1321, %v1328
    %v1330 = vcombine.high %v1329, %v1329
    %v1332 = vunpack.c.l.s4 1966171168
    %v1333 = vunpack.c.0.s8 %v1332
    %v1334 = vlaneseq
    %v1335 = vshrl.u32 %v1334, 7
    %v1336 = vsub.s32 %v1333, %v1335
    %v1337 = vrot.slane %v1329, %v1336
    %v1339 = vunpack.c.l.s4 1966171168
    %v1340 = vunpack.c.0.s8 %v1339
    %v1341 = vlaneseq
    %v1342 = vshrl.u32 %v1341, 7
    %v1343 = vsub.s32 %v1340, %v1342
    %v1344 = vrot.slane %v1330, %v1343
    %1347 = vst.msk [vmem:[#allocation2 + $0x7] sm:$0x1] %vm23, %v1337
    %1348 = vst.msk [vmem:[#allocation2 + $0xf] sm:$0x1] %vm23, %v1344
    // Predicated region
    $region18: #{rnn_forward.1} parent=1 // pred_check
      _
    $region19: #{rnn_forward.1} parent=1 // pred_check_branch
      %1350 = sbr.rel (0) target = $region21
    $region20: #{rnn_forward.1} parent=1 // pred_region
      %s1352 = ssub.s32 256, 256
      %1353 = vsyncadd [#allocation3], %s1352
      %s1354 = sshll.u32 [#allocation2], 4
      %s1355 = int_to_ptr.vmem [resolvable:$true] %s1354
      %1360 = dma.vmem_to_hbm [thread:$0]  %s1355, 256, %s4, [#allocation3], 128, 128, 8
    $region21: #{rnn_forward.1} parent=1 // pred_fallthru
      _
    // Predicated region
    $region22: #{rnn_forward.1} parent=1 // pred_check
      _
    $region23: #{rnn_forward.1} parent=1 // pred_check_branch
      %1362 = sbr.rel (0) target = $region25
    $region24: #{rnn_forward.1} parent=1 // pred_region
      %1363 = dma.done [#allocation3], 256
    $region25: #{rnn_forward.1} parent=1 // pred_fallthru
      _
    %1364 = vsyncpa [#allocation3], 1

</llo_original>
